<compile_context>
chip_gen: v6e
topology: v6e:2x2x1
jax: 0.10.0
libtpu: 0.0.40
codegen_flags: <defaults>
</compile_context>

<pallas_src>
import functools

import jax
import jax.numpy as jnp
from jax.experimental import pallas as pl
from jax.experimental.pallas import tpu as pltpu


# ----------------------------------------------------------------------------
# Pallas kernel: per-image  centered-FFT -> data consistency -> centered-IFFT
# ----------------------------------------------------------------------------
def _dc_kernel(*refs, out_channels, use_gauss):
    it = iter(refs)
    xr_ref = next(it)
    xi_ref = next(it) if out_channels == 2 else None
    yr_ref = next(it)
    yi_ref = next(it)
    m_ref = next(it)
    mhr_ref = next(it)
    mhi_ref = next(it)
    if use_gauss:
        mhs_ref = next(it)
        mhd_ref = next(it)
    mwr_ref = next(it)
    mwi_ref = next(it)
    if use_gauss:
        mws_ref = next(it)
        mwd_ref = next(it)
    o_ref = next(it)

    f32 = jnp.float32

    # Resident DFT matrices (already in the matmul dtype).
    mhr = mhr_ref[...]                 # (H, H) Re(Mh)
    mhi = mhi_ref[...]                 # (H, H) Im(Mh)
    mwr = mwr_ref[...]                 # (W, W) Re(Mw^T)
    mwi = mwi_ref[...]                 # (W, W) Im(Mw^T)
    mdt = mhr.dtype

    def mm(a, b):
        # MXU matmul with f32 accumulation.
        return jnp.dot(a, b, preferred_element_type=f32)

    # ---- Stage 1: T = X @ Mw^T   ((H, W) @ (W, W)).
    xr = xr_ref[0]
    if xi_ref is None:
        # Real-only input: imaginary plane is identically zero -> 2 matmuls.
        t1r = mm(xr, mwr)
        t1i = mm(xr, mwi)
    elif use_gauss:
        xi = xi_ref[0]
        p1 = mm(xr, mwr)
        p2 = mm(xi, mwi)
        p3 = mm(xr + xi, mws_ref[...])
        t1r = p1 - p2
        t1i = p3 - p1 - p2
    else:
        xi = xi_ref[0]
        t1r = mm(xr, mwr) - mm(xi, mwi)
        t1i = mm(xr, mwi) + mm(xi, mwr)

    # ---- Stage 2: F = Mh @ T   ((H, H) @ (H, W)).
    t1r_m = t1r.astype(mdt)
    t1i_m = t1i.astype(mdt)
    if use_gauss:
        p1 = mm(mhr, t1r_m)
        p2 = mm(mhi, t1i_m)
        p3 = mm(mhs_ref[...], t1r_m + t1i_m)
        fr = p1 - p2
        fi = p3 - p1 - p2
    else:
        fr = mm(mhr, t1r_m) - mm(mhi, t1i_m)
        fi = mm(mhr, t1i_m) + mm(mhi, t1r_m)

    # ---- Data consistency (f32):  k = F + (y - F) * (iScale * mask).
    m = m_ref[0]
    kr = fr + (yr_ref[0] - fr) * m
    ki = fi + (yi_ref[0] - fi) * m

    # ---- Stage 3: G1 = conj(Mh) @ K.
    kr_m = kr.astype(mdt)
    ki_m = ki.astype(mdt)
    if use_gauss:
        p1 = mm(mhr, kr_m)
        p2 = mm(mhi, ki_m)
        q = mm(mhd_ref[...], kr_m + ki_m)
        g1r = p1 + p2
        g1i = q - p1 + p2
    else:
        g1r = mm(mhr, kr_m) + mm(mhi, ki_m)
        g1i = mm(mhr, ki_m) - mm(mhi, kr_m)

    # ---- Stage 4: G = G1 @ conj(Mw^T).
    g1r_m = g1r.astype(mdt)
    g1i_m = g1i.astype(mdt)
    if use_gauss:
        p1 = mm(g1r_m, mwr)
        p2 = mm(g1i_m, mwi)
        q = mm(g1r_m + g1i_m, mwd_ref[...])
        gr = p1 + p2
        gi = q - p1 + p2
    else:
        gr = mm(g1r_m, mwr) + mm(g1i_m, mwi)
        gi = mm(g1i_m, mwr) - mm(g1r_m, mwi)

    if out_channels == 1:
        # magnitude output (matches torch.sqrt(re^2 + im^2) for 1-channel input)
        o_ref[0, 0] = jnp.sqrt(gr * gr + gi * gi)
    else:
        o_ref[0, 0] = gr
        o_ref[0, 1] = gi


# ----------------------------------------------------------------------------
# Glue: DFT-matrix setup and pallas_call wrapper
# ----------------------------------------------------------------------------
def _shifted_ortho_dft_matrix(n):
    """Matrix M such that M @ v == fftshift(fft(ifftshift(v), norm='ortho'))."""
    eye = jnp.eye(n, dtype=jnp.complex64)
    return jnp.fft.fftshift(
        jnp.fft.fft(jnp.fft.ifftshift(eye, axes=0), axis=0, norm="ortho"),
        axes=0)


def data_consistency_fastmri(xin, y, mask, lamda=None, is_static=True,
                             matmul_dtype=jnp.bfloat16, use_gauss=True):
    """Pallas implementation of dataConsistencyLayer_fastmri.forward (4-D, isFastmri=True)."""
    # TODO(synk): the 5-D (3-D volume) branch of the PyTorch module is not implemented here.
    B, C, H, W = xin.shape
    assert C in (1, 2), "input must have 1 (real) or 2 (real/imag) channels"
    f32 = jnp.float32
    mdt = matmul_dtype

    # Per-batch image planes in the matmul dtype.
    x_planes = [xin[:, 0].astype(mdt)]
    if C == 2:
        x_planes.append(xin[:, 1].astype(mdt))

    yr = y[..., 0].astype(f32)
    yi = y[..., 1].astype(f32)
    m = jnp.broadcast_to(mask[..., 0], (B, H, W)).astype(f32)
    if not is_static:
        # iScale = lamda / (1 + lamda); folded into the mask (single tiny op).
        m = m * (lamda / (1.0 + lamda)).astype(f32)
    # TODO(synk): for pure column masks the mask could be shipped as (W,) and broadcast
    # in-kernel, removing one (B,H,W) f32 HBM stream on bandwidth-bound v6e/v7x.

    # Shifted orthonormal DFT matrices (and, for the Gauss 3-matmul trick, their
    # sum/diff combos precomputed once here so they are not rebuilt every grid step).
    mh = _shifted_ortho_dft_matrix(H)          # (H, H), applied from the left
    mwt = _shifted_ortho_dft_matrix(W).T       # (W, W), applied from the right
    mhr = jnp.real(mh).astype(f32)
    mhi = jnp.imag(mh).astype(f32)
    mwr = jnp.real(mwt).astype(f32)
    mwi = jnp.imag(mwt).astype(f32)

    mats = [mhr.astype(mdt), mhi.astype(mdt)]
    if use_gauss:
        mats += [(mhr + mhi).astype(mdt), (mhr - mhi).astype(mdt)]
    mats += [mwr.astype(mdt), mwi.astype(mdt)]
    if use_gauss:
        mats += [(mwr + mwi).astype(mdt), (mwr - mwi).astype(mdt)]
    n_h = 4 if use_gauss else 2

    cout = 1 if C == 1 else 2
    kernel = functools.partial(_dc_kernel, out_channels=cout, use_gauss=use_gauss)

    # BlockSpecs: one image per grid step; DFT matrices resident across all steps.
    img_spec = pl.BlockSpec((1, H, W), lambda b: (b, 0, 0))
    mat_h_spec = pl.BlockSpec((H, H), lambda b: (0, 0))
    mat_w_spec = pl.BlockSpec((W, W), lambda b: (0, 0))
    in_specs = ([img_spec] * len(x_planes)            # x real (+ imag)
                + [img_spec, img_spec, img_spec]      # yr, yi, mask
                + [mat_h_spec] * n_h + [mat_w_spec] * n_h)
    out_spec = pl.BlockSpec((1, cout, H, W), lambda b: (b, 0, 0, 0))

    # VMEM budget: resident matrices + double-buffered per-step I/O + f32 intermediates,
    # clamped to the chip's physical VMEM with headroom.
    itm = jnp.dtype(mdt).itemsize
    mats_bytes = sum(int(a.size) for a in mats) * itm
    per_step_in = (len(x_planes) * itm + 3 * 4) * H * W
    per_step_out = cout * H * W * 4
    scratch = 16 * H * W * 4
    est = mats_bytes + 2 * (per_step_in + per_step_out) + scratch
    try:
        cap = int(getattr(pltpu.get_tpu_info(), "vmem_capacity_bytes", 64 * 2 ** 20))
    except Exception:  # pragma: no cover - conservative fallback
        cap = 64 * 2 ** 20
    vmem_limit = int(min(int(0.75 * cap), max(8 * 2 ** 20, 2 * est)))
    # TODO(synk): for 640-class k-space on v7x (64 MiB VMEM), add a W-tiling grid axis
    # for stages 2/3 + the DC mix (columns are independent there).

    out = pl.pallas_call(
        kernel,
        out_shape=jax.ShapeDtypeStruct((B, cout, H, W), jnp.float32),
        grid_spec=pltpu.PrefetchScalarGridSpec(
            num_scalar_prefetch=0,
            grid=(B,),
            in_specs=in_specs,
            out_specs=out_spec),
        compiler_params=pltpu.CompilerParams(
            dimension_semantics=("parallel",),
            vmem_limit_bytes=vmem_limit),
    )(*x_planes, yr, yi, m, *mats)

    return out                                   # already (B, cout, H, W)


# ----------------------------------------------------------------------------
# Pure-JAX reference (mirrors the PyTorch / fastMRI semantics) for checking.
# ----------------------------------------------------------------------------
def _reference(xin, y, mask, iscale=1.0):
    if xin.shape[1] == 1:
        xc = xin[:, 0].astype(jnp.complex64)
    else:
        xc = (xin[:, 0] + 1j * xin[:, 1]).astype(jnp.complex64)
    xf = jnp.fft.fftshift(
        jnp.fft.fft2(jnp.fft.ifftshift(xc, axes=(-2, -1)), norm="ortho"),
        axes=(-2, -1))
    yc = (y[..., 0] + 1j * y[..., 1]).astype(jnp.complex64)
    kf = xf + (yc - xf) * iscale * mask[..., 0]
    out = jnp.fft.fftshift(
        jnp.fft.ifft2(jnp.fft.ifftshift(kf, axes=(-2, -1)), norm="ortho"),
        axes=(-2, -1))
    if xin.shape[1] == 1:
        return jnp.abs(out)[:, None]
    return jnp.stack([out.real, out.imag], axis=1).astype(jnp.float32)


if __name__ == "__main__":
    key = jax.random.PRNGKey(0)
    k_lam, k_x1, k_x2, k_y, k_m = jax.random.split(key, 5)

    B, H, W = 2, 16, 16
    # deterministic "parameter" (unused when isStatic=True, the module default)
    lamda = jax.random.uniform(k_lam, (1,), jnp.float32)[0]

    y = jax.random.normal(k_y, (B, H, W, 2), jnp.float32)
    # column-style undersampling mask, broadcast to (B, H, W, 1)
    cols = (jax.random.uniform(k_m, (W,)) > 0.5).astype(jnp.float32)
    mask = jnp.broadcast_to(cols[None, None, :, None], (B, H, W, 1))

    x2 = jax.random.normal(k_x2, (B, 2, H, W), jnp.float32)   # [real, imag] input
    x1 = jax.random.normal(k_x1, (B, 1, H, W), jnp.float32)   # real-only input

    ref2 = _reference(x2, y, mask)
    ref1 = _reference(x1, y, mask)

    # --- f32-matmul paths: tight structural check against the FFT reference ---
    out2_f32 = jax.block_until_ready(
        data_consistency_fastmri(x2, y, mask, lamda, matmul_dtype=jnp.float32))
    assert out2_f32.shape == (B, 2, H, W)
    assert float(jnp.max(jnp.abs(out2_f32 - ref2))) < 2e-3

    out2_f32_plain = jax.block_until_ready(
        data_consistency_fastmri(x2, y, mask, lamda, matmul_dtype=jnp.float32,
                                 use_gauss=False))
    assert float(jnp.max(jnp.abs(out2_f32_plain - ref2))) < 2e-3

    # --- bf16 fast paths (MXU-native operands, f32 accumulation) ---
    out2 = jax.block_until_ready(data_consistency_fastmri(x2, y, mask, lamda))
    assert out2.shape == (B, 2, H, W)
    assert float(jnp.max(jnp.abs(out2 - ref2))) < 1.5e-1

    out2_plain = jax.block_until_ready(
        data_consistency_fastmri(x2, y, mask, lamda, use_gauss=False))
    assert float(jnp.max(jnp.abs(out2_plain - ref2))) < 1.5e-1

    out1 = jax.block_until_ready(data_consistency_fastmri(x1, y, mask, lamda))
    assert out1.shape == (B, 1, H, W)
    assert float(jnp.max(jnp.abs(out1 - ref1))) < 1.5e-1

    print("KERNEL_OK")
</pallas_src>

<mosaic_0001>
module attributes {stable_mosaic.version = 11 : i64} {
  func.func @_dc_kernel(%arg0: i32, %arg1: memref<1x16x16xf32, #tpu.memory_space<vmem>>, %arg2: memref<1x16x16xf32, #tpu.memory_space<vmem>>, %arg3: memref<1x16x16xf32, #tpu.memory_space<vmem>>, %arg4: memref<1x16x16xf32, #tpu.memory_space<vmem>>, %arg5: memref<1x16x16xf32, #tpu.memory_space<vmem>>, %arg6: memref<16x16xf32, #tpu.memory_space<vmem>>, %arg7: memref<16x16xf32, #tpu.memory_space<vmem>>, %arg8: memref<16x16xf32, #tpu.memory_space<vmem>>, %arg9: memref<16x16xf32, #tpu.memory_space<vmem>>, %arg10: memref<16x16xf32, #tpu.memory_space<vmem>>, %arg11: memref<16x16xf32, #tpu.memory_space<vmem>>, %arg12: memref<16x16xf32, #tpu.memory_space<vmem>>, %arg13: memref<16x16xf32, #tpu.memory_space<vmem>>, %arg14: memref<1x2x16x16xf32, #tpu.memory_space<vmem>>) attributes {dimension_semantics = [#tpu.dimension_semantics<parallel>], iteration_bounds = array<i64: 2>, scalar_prefetch = 0 : i64, scratch_operands = 0 : i64, tpu.core_type = #tpu.core_type<tc>, window_params = [{transform_indices = @transform_0, window_bounds = array<i64: 1, 16, 16>}, {transform_indices = @transform_1, window_bounds = array<i64: 1, 16, 16>}, {transform_indices = @transform_2, window_bounds = array<i64: 1, 16, 16>}, {transform_indices = @transform_3, window_bounds = array<i64: 1, 16, 16>}, {transform_indices = @transform_4, window_bounds = array<i64: 1, 16, 16>}, {pipeline_mode = #tpu.pipeline_mode<synchronous>, transform_indices = @transform_5, window_bounds = array<i64: 16, 16>}, {pipeline_mode = #tpu.pipeline_mode<synchronous>, transform_indices = @transform_6, window_bounds = array<i64: 16, 16>}, {pipeline_mode = #tpu.pipeline_mode<synchronous>, transform_indices = @transform_7, window_bounds = array<i64: 16, 16>}, {pipeline_mode = #tpu.pipeline_mode<synchronous>, transform_indices = @transform_8, window_bounds = array<i64: 16, 16>}, {pipeline_mode = #tpu.pipeline_mode<synchronous>, transform_indices = @transform_9, window_bounds = array<i64: 16, 16>}, {pipeline_mode = #tpu.pipeline_mode<synchronous>, transform_indices = @transform_10, window_bounds = array<i64: 16, 16>}, {pipeline_mode = #tpu.pipeline_mode<synchronous>, transform_indices = @transform_11, window_bounds = array<i64: 16, 16>}, {pipeline_mode = #tpu.pipeline_mode<synchronous>, transform_indices = @transform_12, window_bounds = array<i64: 16, 16>}, {transform_indices = @transform_13, window_bounds = array<i64: 1, 2, 16, 16>}]} {
    %c0 = arith.constant 0 : index
    %c0_0 = arith.constant 0 : index
    %0 = vector.load %arg6[%c0, %c0_0] : memref<16x16xf32, #tpu.memory_space<vmem>>, vector<16x16xf32>
    %c0_1 = arith.constant 0 : index
    %c0_2 = arith.constant 0 : index
    %1 = vector.load %arg7[%c0_1, %c0_2] : memref<16x16xf32, #tpu.memory_space<vmem>>, vector<16x16xf32>
    %c0_3 = arith.constant 0 : index
    %c0_4 = arith.constant 0 : index
    %2 = vector.load %arg10[%c0_3, %c0_4] : memref<16x16xf32, #tpu.memory_space<vmem>>, vector<16x16xf32>
    %c0_5 = arith.constant 0 : index
    %c0_6 = arith.constant 0 : index
    %3 = vector.load %arg11[%c0_5, %c0_6] : memref<16x16xf32, #tpu.memory_space<vmem>>, vector<16x16xf32>
    %c0_7 = arith.constant 0 : index
    %c0_8 = arith.constant 0 : index
    %c0_9 = arith.constant 0 : index
    %4 = vector.load %arg1[%c0_7, %c0_8, %c0_9] : memref<1x16x16xf32, #tpu.memory_space<vmem>>, vector<1x16x16xf32>
    %5 = vector.shape_cast %4 : vector<1x16x16xf32> to vector<16x16xf32>
    %c0_10 = arith.constant 0 : index
    %c0_11 = arith.constant 0 : index
    %c0_12 = arith.constant 0 : index
    %6 = vector.load %arg2[%c0_10, %c0_11, %c0_12] : memref<1x16x16xf32, #tpu.memory_space<vmem>>, vector<1x16x16xf32>
    %7 = vector.shape_cast %6 : vector<1x16x16xf32> to vector<16x16xf32>
    %cst = arith.constant dense<0.000000e+00> : vector<16x16xf32>
    %8 = tpu.matmul %5, %2, %cst {dimension_numbers = #tpu.dot_dimension_numbers<[1], [0], [0], [1], [0, 0, 1, 1], [], []>} : vector<16x16xf32>, vector<16x16xf32>, vector<16x16xf32> -> vector<16x16xf32>
    %cst_13 = arith.constant dense<0.000000e+00> : vector<16x16xf32>
    %9 = tpu.matmul %7, %3, %cst_13 {dimension_numbers = #tpu.dot_dimension_numbers<[1], [0], [0], [1], [0, 0, 1, 1], [], []>} : vector<16x16xf32>, vector<16x16xf32>, vector<16x16xf32> -> vector<16x16xf32>
    %10 = arith.addf %5, %7 : vector<16x16xf32>
    %c0_14 = arith.constant 0 : index
    %c0_15 = arith.constant 0 : index
    %11 = vector.load %arg12[%c0_14, %c0_15] : memref<16x16xf32, #tpu.memory_space<vmem>>, vector<16x16xf32>
    %cst_16 = arith.constant dense<0.000000e+00> : vector<16x16xf32>
    %12 = tpu.matmul %10, %11, %cst_16 {dimension_numbers = #tpu.dot_dimension_numbers<[1], [0], [0], [1], [0, 0, 1, 1], [], []>} : vector<16x16xf32>, vector<16x16xf32>, vector<16x16xf32> -> vector<16x16xf32>
    %13 = arith.subf %8, %9 : vector<16x16xf32>
    %14 = arith.subf %12, %8 : vector<16x16xf32>
    %15 = arith.subf %14, %9 : vector<16x16xf32>
    %cst_17 = arith.constant dense<0.000000e+00> : vector<16x16xf32>
    %16 = tpu.matmul %0, %13, %cst_17 {dimension_numbers = #tpu.dot_dimension_numbers<[1], [0], [0], [1], [0, 0, 1, 1], [], []>} : vector<16x16xf32>, vector<16x16xf32>, vector<16x16xf32> -> vector<16x16xf32>
    %cst_18 = arith.constant dense<0.000000e+00> : vector<16x16xf32>
    %17 = tpu.matmul %1, %15, %cst_18 {dimension_numbers = #tpu.dot_dimension_numbers<[1], [0], [0], [1], [0, 0, 1, 1], [], []>} : vector<16x16xf32>, vector<16x16xf32>, vector<16x16xf32> -> vector<16x16xf32>
    %c0_19 = arith.constant 0 : index
    %c0_20 = arith.constant 0 : index
    %18 = vector.load %arg8[%c0_19, %c0_20] : memref<16x16xf32, #tpu.memory_space<vmem>>, vector<16x16xf32>
    %19 = arith.addf %13, %15 : vector<16x16xf32>
    %cst_21 = arith.constant dense<0.000000e+00> : vector<16x16xf32>
    %20 = tpu.matmul %18, %19, %cst_21 {dimension_numbers = #tpu.dot_dimension_numbers<[1], [0], [0], [1], [0, 0, 1, 1], [], []>} : vector<16x16xf32>, vector<16x16xf32>, vector<16x16xf32> -> vector<16x16xf32>
    %21 = arith.subf %16, %17 : vector<16x16xf32>
    %22 = arith.subf %20, %16 : vector<16x16xf32>
    %23 = arith.subf %22, %17 : vector<16x16xf32>
    %c0_22 = arith.constant 0 : index
    %c0_23 = arith.constant 0 : index
    %c0_24 = arith.constant 0 : index
    %24 = vector.load %arg5[%c0_22, %c0_23, %c0_24] : memref<1x16x16xf32, #tpu.memory_space<vmem>>, vector<1x16x16xf32>
    %25 = vector.shape_cast %24 : vector<1x16x16xf32> to vector<16x16xf32>
    %c0_25 = arith.constant 0 : index
    %c0_26 = arith.constant 0 : index
    %c0_27 = arith.constant 0 : index
    %26 = vector.load %arg3[%c0_25, %c0_26, %c0_27] : memref<1x16x16xf32, #tpu.memory_space<vmem>>, vector<1x16x16xf32>
    %27 = vector.shape_cast %26 : vector<1x16x16xf32> to vector<16x16xf32>
    %28 = arith.subf %27, %21 : vector<16x16xf32>
    %29 = arith.mulf %28, %25 : vector<16x16xf32>
    %30 = arith.addf %21, %29 : vector<16x16xf32>
    %c0_28 = arith.constant 0 : index
    %c0_29 = arith.constant 0 : index
    %c0_30 = arith.constant 0 : index
    %31 = vector.load %arg4[%c0_28, %c0_29, %c0_30] : memref<1x16x16xf32, #tpu.memory_space<vmem>>, vector<1x16x16xf32>
    %32 = vector.shape_cast %31 : vector<1x16x16xf32> to vector<16x16xf32>
    %33 = arith.subf %32, %23 : vector<16x16xf32>
    %34 = arith.mulf %33, %25 : vector<16x16xf32>
    %35 = arith.addf %23, %34 : vector<16x16xf32>
    %cst_31 = arith.constant dense<0.000000e+00> : vector<16x16xf32>
    %36 = tpu.matmul %0, %30, %cst_31 {dimension_numbers = #tpu.dot_dimension_numbers<[1], [0], [0], [1], [0, 0, 1, 1], [], []>} : vector<16x16xf32>, vector<16x16xf32>, vector<16x16xf32> -> vector<16x16xf32>
    %cst_32 = arith.constant dense<0.000000e+00> : vector<16x16xf32>
    %37 = tpu.matmul %1, %35, %cst_32 {dimension_numbers = #tpu.dot_dimension_numbers<[1], [0], [0], [1], [0, 0, 1, 1], [], []>} : vector<16x16xf32>, vector<16x16xf32>, vector<16x16xf32> -> vector<16x16xf32>
    %c0_33 = arith.constant 0 : index
    %c0_34 = arith.constant 0 : index
    %38 = vector.load %arg9[%c0_33, %c0_34] : memref<16x16xf32, #tpu.memory_space<vmem>>, vector<16x16xf32>
    %39 = arith.addf %30, %35 : vector<16x16xf32>
    %cst_35 = arith.constant dense<0.000000e+00> : vector<16x16xf32>
    %40 = tpu.matmul %38, %39, %cst_35 {dimension_numbers = #tpu.dot_dimension_numbers<[1], [0], [0], [1], [0, 0, 1, 1], [], []>} : vector<16x16xf32>, vector<16x16xf32>, vector<16x16xf32> -> vector<16x16xf32>
    %41 = arith.addf %36, %37 : vector<16x16xf32>
    %42 = arith.subf %40, %36 : vector<16x16xf32>
    %43 = arith.addf %42, %37 : vector<16x16xf32>
    %cst_36 = arith.constant dense<0.000000e+00> : vector<16x16xf32>
    %44 = tpu.matmul %41, %2, %cst_36 {dimension_numbers = #tpu.dot_dimension_numbers<[1], [0], [0], [1], [0, 0, 1, 1], [], []>} : vector<16x16xf32>, vector<16x16xf32>, vector<16x16xf32> -> vector<16x16xf32>
    %cst_37 = arith.constant dense<0.000000e+00> : vector<16x16xf32>
    %45 = tpu.matmul %43, %3, %cst_37 {dimension_numbers = #tpu.dot_dimension_numbers<[1], [0], [0], [1], [0, 0, 1, 1], [], []>} : vector<16x16xf32>, vector<16x16xf32>, vector<16x16xf32> -> vector<16x16xf32>
    %46 = arith.addf %41, %43 : vector<16x16xf32>
    %c0_38 = arith.constant 0 : index
    %c0_39 = arith.constant 0 : index
    %47 = vector.load %arg13[%c0_38, %c0_39] : memref<16x16xf32, #tpu.memory_space<vmem>>, vector<16x16xf32>
    %cst_40 = arith.constant dense<0.000000e+00> : vector<16x16xf32>
    %48 = tpu.matmul %46, %47, %cst_40 {dimension_numbers = #tpu.dot_dimension_numbers<[1], [0], [0], [1], [0, 0, 1, 1], [], []>} : vector<16x16xf32>, vector<16x16xf32>, vector<16x16xf32> -> vector<16x16xf32>
    %49 = arith.addf %44, %45 : vector<16x16xf32>
    %50 = arith.subf %48, %44 : vector<16x16xf32>
    %51 = arith.addf %50, %45 : vector<16x16xf32>
    %c0_41 = arith.constant 0 : index
    %c0_42 = arith.constant 0 : index
    %c0_43 = arith.constant 0 : index
    %c0_44 = arith.constant 0 : index
    %52 = vector.load %arg14[%c0_41, %c0_42, %c0_43, %c0_44] : memref<1x2x16x16xf32, #tpu.memory_space<vmem>>, vector<1x1x16x16xf32>
    %53 = vector.shape_cast %52 : vector<1x1x16x16xf32> to vector<16x16xf32>
    %54 = vector.shape_cast %49 : vector<16x16xf32> to vector<1x1x16x16xf32>
    tpu.vector_store %arg14[%c0_41, %c0_42, %c0_43, %c0_44], %54 {strides = array<i32>} : memref<1x2x16x16xf32, #tpu.memory_space<vmem>>, vector<1x1x16x16xf32>,
    %c0_45 = arith.constant 0 : index
    %c1 = arith.constant 1 : index
    %c0_46 = arith.constant 0 : index
    %c0_47 = arith.constant 0 : index
    %55 = vector.load %arg14[%c0_45, %c1, %c0_46, %c0_47] : memref<1x2x16x16xf32, #tpu.memory_space<vmem>>, vector<1x1x16x16xf32>
    %56 = vector.shape_cast %55 : vector<1x1x16x16xf32> to vector<16x16xf32>
    %57 = vector.shape_cast %51 : vector<16x16xf32> to vector<1x1x16x16xf32>
    tpu.vector_store %arg14[%c0_45, %c1, %c0_46, %c0_47], %57 {strides = array<i32>} : memref<1x2x16x16xf32, #tpu.memory_space<vmem>>, vector<1x1x16x16xf32>,
    return
  }
  func.func @transform_0(%arg0: i32) -> (i32, i32, i32) {
    %c0_i32 = arith.constant 0 : i32
    %c0_i32_0 = arith.constant 0 : i32
    %c0_i32_1 = arith.constant 0 : i32
    return %arg0, %c0_i32, %c0_i32_0 : i32, i32, i32
  }
  func.func @transform_1(%arg0: i32) -> (i32, i32, i32) {
    %c0_i32 = arith.constant 0 : i32
    %c0_i32_0 = arith.constant 0 : i32
    %c0_i32_1 = arith.constant 0 : i32
    return %arg0, %c0_i32, %c0_i32_0 : i32, i32, i32
  }
  func.func @transform_2(%arg0: i32) -> (i32, i32, i32) {
    %c0_i32 = arith.constant 0 : i32
    %c0_i32_0 = arith.constant 0 : i32
    %c0_i32_1 = arith.constant 0 : i32
    return %arg0, %c0_i32, %c0_i32_0 : i32, i32, i32
  }
  func.func @transform_3(%arg0: i32) -> (i32, i32, i32) {
    %c0_i32 = arith.constant 0 : i32
    %c0_i32_0 = arith.constant 0 : i32
    %c0_i32_1 = arith.constant 0 : i32
    return %arg0, %c0_i32, %c0_i32_0 : i32, i32, i32
  }
  func.func @transform_4(%arg0: i32) -> (i32, i32, i32) {
    %c0_i32 = arith.constant 0 : i32
    %c0_i32_0 = arith.constant 0 : i32
    %c0_i32_1 = arith.constant 0 : i32
    return %arg0, %c0_i32, %c0_i32_0 : i32, i32, i32
  }
  func.func @transform_5(%arg0: i32) -> (i32, i32) {
    %c0_i32 = arith.constant 0 : i32
    %c0_i32_0 = arith.constant 0 : i32
    %c0_i32_1 = arith.constant 0 : i32
    return %c0_i32, %c0_i32_0 : i32, i32
  }
  func.func @transform_6(%arg0: i32) -> (i32, i32) {
    %c0_i32 = arith.constant 0 : i32
    %c0_i32_0 = arith.constant 0 : i32
    %c0_i32_1 = arith.constant 0 : i32
    return %c0_i32, %c0_i32_0 : i32, i32
  }
  func.func @transform_7(%arg0: i32) -> (i32, i32) {
    %c0_i32 = arith.constant 0 : i32
    %c0_i32_0 = arith.constant 0 : i32
    %c0_i32_1 = arith.constant 0 : i32
    return %c0_i32, %c0_i32_0 : i32, i32
  }
  func.func @transform_8(%arg0: i32) -> (i32, i32) {
    %c0_i32 = arith.constant 0 : i32
    %c0_i32_0 = arith.constant 0 : i32
    %c0_i32_1 = arith.constant 0 : i32
    return %c0_i32, %c0_i32_0 : i32, i32
  }
  func.func @transform_9(%arg0: i32) -> (i32, i32) {
    %c0_i32 = arith.constant 0 : i32
    %c0_i32_0 = arith.constant 0 : i32
    %c0_i32_1 = arith.constant 0 : i32
    return %c0_i32, %c0_i32_0 : i32, i32
  }
  func.func @transform_10(%arg0: i32) -> (i32, i32) {
    %c0_i32 = arith.constant 0 : i32
    %c0_i32_0 = arith.constant 0 : i32
    %c0_i32_1 = arith.constant 0 : i32
    return %c0_i32, %c0_i32_0 : i32, i32
  }
  func.func @transform_11(%arg0: i32) -> (i32, i32) {
    %c0_i32 = arith.constant 0 : i32
    %c0_i32_0 = arith.constant 0 : i32
    %c0_i32_1 = arith.constant 0 : i32
    return %c0_i32, %c0_i32_0 : i32, i32
  }
  func.func @transform_12(%arg0: i32) -> (i32, i32) {
    %c0_i32 = arith.constant 0 : i32
    %c0_i32_0 = arith.constant 0 : i32
    %c0_i32_1 = arith.constant 0 : i32
    return %c0_i32, %c0_i32_0 : i32, i32
  }
  func.func @transform_13(%arg0: i32) -> (i32, i32, i32, i32) {
    %c0_i32 = arith.constant 0 : i32
    %c0_i32_0 = arith.constant 0 : i32
    %c0_i32_1 = arith.constant 0 : i32
    %c0_i32_2 = arith.constant 0 : i32
    return %arg0, %c0_i32, %c0_i32_0, %c0_i32_1 : i32, i32, i32, i32
  }
}

</mosaic_0001>

<llo_original>
// kernel: tpu_custom_call.1
$region0: #{tpu_custom_call.1}
  #allocation0 [shape = 'u32[]', space=smem, size = 0x4, offset = 0x4, fixed_abs, tag = 'smem constant byte address 0x4 - core index']
  #allocation1 [shape = 'u32[144,128]{1,0:T(1,128)}', space=vmem, size = 0x12000, scoped, tag = 'internal scratch']
  %s0 = inlined_call_operand.hbm [shape: f32[2,16,16], index: 0, kind: input, shape index: {}]
  %s1 = inlined_call_operand.hbm [shape: f32[2,16,16], index: 1, kind: input, shape index: {}]
  %s2 = inlined_call_operand.hbm [shape: f32[2,16,16], index: 2, kind: input, shape index: {}]
  %s3 = inlined_call_operand.hbm [shape: f32[2,16,16], index: 3, kind: input, shape index: {}]
  %s4 = inlined_call_operand.hbm [shape: f32[2,16,16], index: 4, kind: input, shape index: {}]
  %s5 = inlined_call_operand.hbm [shape: f32[16,16], index: 5, kind: input, shape index: {}]
  %s6 = inlined_call_operand.hbm [shape: f32[16,16], index: 6, kind: input, shape index: {}]
  %s7 = inlined_call_operand.hbm [shape: f32[16,16], index: 7, kind: input, shape index: {}]
  %s8 = inlined_call_operand.hbm [shape: f32[16,16], index: 8, kind: input, shape index: {}]
  %s9 = inlined_call_operand.vmem [shape: f32[16,16], index: 9, kind: input, shape index: {}]
  %s10 = inlined_call_operand.hbm [shape: f32[16,16], index: 10, kind: input, shape index: {}]
  %s11 = inlined_call_operand.hbm [shape: f32[16,16], index: 11, kind: input, shape index: {}]
  %s12 = inlined_call_operand.hbm [shape: f32[16,16], index: 12, kind: input, shape index: {}]
  %s13 = inlined_call_operand.hbm [shape: f32[2,2,16,16], index: 13, kind: output, shape index: {}]
  %s14 = sld [smem:[#allocation0]]
  $region133: #{tpu_custom_call.1} parent=0
    _
  %s16 = ssub.s32 1, %s14
  %s17 = scalar_select 0, %s16, %s14
  $region1: #{tpu_custom_call.1} parent=0
    #allocation2 [shape = 'u8[16384]{0}', space=vmem, size = 0x4000, scoped, tag = 'input window, operand 0']
    #allocation3 [shape = 's32[2]{0}', space=sflag, size = 0x8, scoped, tag = 'scoped memory for tpu_custom_call.1']
    #allocation4 [shape = 's32[2]{0}', space=sflag, size = 0x8, scoped, tag = 'scoped memory for tpu_custom_call.1']
    #allocation5 [shape = 'u8[16384]{0}', space=vmem, size = 0x4000, scoped, tag = 'input window, operand 1']
    #allocation6 [shape = 's32[2]{0}', space=sflag, size = 0x8, scoped, tag = 'scoped memory for tpu_custom_call.1']
    #allocation7 [shape = 'u8[16384]{0}', space=vmem, size = 0x4000, scoped, tag = 'input window, operand 2']
    #allocation8 [shape = 'u8[16384]{0}', space=vmem, size = 0x4000, scoped, tag = 'input window, operand 3']
    #allocation9 [shape = 's32[2]{0}', space=sflag, size = 0x8, scoped, tag = 'scoped memory for tpu_custom_call.1']
    #allocation10 [shape = 'u8[16384]{0}', space=vmem, size = 0x4000, scoped, tag = 'input window, operand 4']
    #allocation11 [shape = 'u8[8192]{0}', space=vmem, size = 0x2000, scoped, tag = 'input window, operand 5, single buffered']
    #allocation12 [shape = 's32[1]{0}', space=sflag, size = 0x4, scoped, tag = 'scoped memory for tpu_custom_call.1']
    #allocation13 [shape = 'u8[8192]{0}', space=vmem, size = 0x2000, scoped, tag = 'input window, operand 6, single buffered']
    #allocation14 [shape = 'u8[8192]{0}', space=vmem, size = 0x2000, scoped, tag = 'input window, operand 7, single buffered']
    #allocation15 [shape = 's32[1]{0}', space=sflag, size = 0x4, scoped, tag = 'scoped memory for tpu_custom_call.1']
    #allocation16 [shape = 'u8[8192]{0}', space=vmem, size = 0x2000, scoped, tag = 'input window, operand 8, single buffered']
    #allocation17 [shape = 'u8[8192]{0}', space=vmem, size = 0x2000, scoped, tag = 'input window, operand 10, single buffered']
    #allocation18 [shape = 's32[1]{0}', space=sflag, size = 0x4, scoped, tag = 'scoped memory for tpu_custom_call.1']
    #allocation19 [shape = 'u8[8192]{0}', space=vmem, size = 0x2000, scoped, tag = 'input window, operand 11, single buffered']
    #allocation20 [shape = 'u8[8192]{0}', space=vmem, size = 0x2000, scoped, tag = 'input window, operand 12, single buffered']
    #allocation21 [shape = 's32[1]{0}', space=sflag, size = 0x4, scoped, tag = 'scoped memory for tpu_custom_call.1']
    #allocation22 [shape = 'u8[32768]{0}', space=vmem, size = 0x8000, scoped, tag = 'output window, operand 0']
    %18 = vsyncpa [#allocation3], 0
    %s19 = scalar_lea.sflag [#allocation3], 1
    %20 = vsyncpa %s19, 0
    %21 = vsyncpa [#allocation6], 0
    %s22 = scalar_lea.sflag [#allocation6], 1
    %23 = vsyncpa %s22, 0
    %24 = vsyncpa [#allocation9], 0
    %s25 = scalar_lea.sflag [#allocation9], 1
    %26 = vsyncpa %s25, 0
    %27 = vsyncpa [#allocation12], 0
    %28 = vsyncpa [#allocation15], 0
    %29 = vsyncpa [#allocation18], 0
    %30 = vsyncpa [#allocation21], 0
    %31 = vsyncpa [#allocation4], 0
    %s32 = scalar_lea.sflag [#allocation4], 1
    %33 = vsyncpa %s32, 0
    loop: start=0, step=1, limit=4
    $region2: #{tpu_custom_call.1} parent=1 // loop_pre_header
      _
    $region3: #{tpu_custom_call.1} parent=1 // loop_header
      %s35 = sphi 0, %s39
      %p36 = scmp.ge.s32.totalorder %s35, 4
      %s45 = sphi 0, %s47
      %s48 = sphi 0, %s45
      %s49 = sphi 0, %s48
      %s65 = sphi 0, %s49
      %s71 = sphi 0, %s73
      %s74 = sphi 0, %s71
      %s75 = sphi 0, %s74
      %s91 = sphi 0, %s75
      %s97 = sphi 0, %s99
      %s100 = sphi 0, %s97
      %s101 = sphi 0, %s100
      %s117 = sphi 0, %s101
      %s123 = sphi 0, %s125
      %s126 = sphi 0, %s123
      %s127 = sphi 0, %s126
      %s143 = sphi 0, %s127
      %s149 = sphi 0, %s151
      %s152 = sphi 0, %s149
      %s153 = sphi 0, %s152
      %s169 = sphi 0, %s153
      %s173 = sphi 0, %s173
      %s175 = sphi 0, %s173
      %s176 = sphi 0, %s175
      %s190 = sphi 0, %s176
      %s194 = sphi 0, %s194
      %s196 = sphi 0, %s194
      %s197 = sphi 0, %s196
      %s211 = sphi 0, %s197
      %s215 = sphi 0, %s215
      %s217 = sphi 0, %s215
      %s218 = sphi 0, %s217
      %s232 = sphi 0, %s218
      %s236 = sphi 0, %s236
      %s238 = sphi 0, %s236
      %s239 = sphi 0, %s238
      %s253 = sphi 0, %s239
      %s257 = sphi 0, %s257
      %s259 = sphi 0, %s257
      %s260 = sphi 0, %s259
      %s274 = sphi 0, %s260
      %s278 = sphi 0, %s278
      %s280 = sphi 0, %s278
      %s281 = sphi 0, %s280
      %s295 = sphi 0, %s281
      %s299 = sphi 0, %s299
      %s301 = sphi 0, %s299
      %s302 = sphi 0, %s301
      %s316 = sphi 0, %s302
      %s320 = sphi 0, %s320
      %s322 = sphi 0, %s320
      %s323 = sphi 0, %s322
      %s337 = sphi 0, %s323
      %s343 = sphi 0, %s345
      %s346 = sphi 0, %s343
      %s347 = sphi 0, %s346
      %s363 = sphi 0, %s347
    $region4: #{tpu_custom_call.1} parent=1 // loop_header_branch
      %38 = sbr.rel (%p36) target = $region8
    $region5: #{tpu_custom_call.1} parent=1 // loop_body
      %s40 = ssub.s32 %s35, 1
      %s41 = ssub.s32 %s35, 2
      %s42 = sadd.s32 %s35, 1
      %s43 = ssub.s32 %s35, %s42
      %p44 = scmp.eq.s32.totalorder %s43, 0
      %s46 = sadd.s32 %s45, 1
      %s47 = scalar_select %p44, %s45, %s46
      %p50 = pneg %p44
      %p51 = scmp.eq.s32.totalorder %s35, 1
      %p52 = por %p50, %p51
      %p53 = scmp.ne.s32.totalorder %s45, %s48
      %p54 = scmp.eq.s32.totalorder %s35, 0
      %p55 = por %p53, %p54
      %p56 = scmp.ne.s32.totalorder %s45, %s48
      %p57 = scmp.eq.s32.totalorder %s40, 1
      %p58 = por %p56, %p57
      %p59 = scmp.ne.s32.totalorder %s48, %s49
      %p60 = scmp.eq.s32.totalorder %s40, 0
      %p61 = por %p59, %p60
      %p62 = scmp.ne.s32.totalorder %s48, %s49
      %p63 = scmp.eq.s32.totalorder %s41, 1
      %p64 = por %p62, %p63
      %p66 = scmp.ne.s32.totalorder %s49, %s65
      %p67 = scmp.eq.s32.totalorder %s41, 0
      %p68 = por %p66, %p67
      %s69 = ssub.s32 %s35, %s42
      %p70 = scmp.eq.s32.totalorder %s69, 0
      %s72 = sadd.s32 %s71, 1
      %s73 = scalar_select %p70, %s71, %s72
      %p76 = pneg %p70
      %p77 = scmp.eq.s32.totalorder %s35, 1
      %p78 = por %p76, %p77
      %p79 = scmp.ne.s32.totalorder %s71, %s74
      %p80 = scmp.eq.s32.totalorder %s35, 0
      %p81 = por %p79, %p80
      %p82 = scmp.ne.s32.totalorder %s71, %s74
      %p83 = scmp.eq.s32.totalorder %s40, 1
      %p84 = por %p82, %p83
      %p85 = scmp.ne.s32.totalorder %s74, %s75
      %p86 = scmp.eq.s32.totalorder %s40, 0
      %p87 = por %p85, %p86
      %p88 = scmp.ne.s32.totalorder %s74, %s75
      %p89 = scmp.eq.s32.totalorder %s41, 1
      %p90 = por %p88, %p89
      %p92 = scmp.ne.s32.totalorder %s75, %s91
      %p93 = scmp.eq.s32.totalorder %s41, 0
      %p94 = por %p92, %p93
      %s95 = ssub.s32 %s35, %s42
      %p96 = scmp.eq.s32.totalorder %s95, 0
      %s98 = sadd.s32 %s97, 1
      %s99 = scalar_select %p96, %s97, %s98
      %p102 = pneg %p96
      %p103 = scmp.eq.s32.totalorder %s35, 1
      %p104 = por %p102, %p103
      %p105 = scmp.ne.s32.totalorder %s97, %s100
      %p106 = scmp.eq.s32.totalorder %s35, 0
      %p107 = por %p105, %p106
      %p108 = scmp.ne.s32.totalorder %s97, %s100
      %p109 = scmp.eq.s32.totalorder %s40, 1
      %p110 = por %p108, %p109
      %p111 = scmp.ne.s32.totalorder %s100, %s101
      %p112 = scmp.eq.s32.totalorder %s40, 0
      %p113 = por %p111, %p112
      %p114 = scmp.ne.s32.totalorder %s100, %s101
      %p115 = scmp.eq.s32.totalorder %s41, 1
      %p116 = por %p114, %p115
      %p118 = scmp.ne.s32.totalorder %s101, %s117
      %p119 = scmp.eq.s32.totalorder %s41, 0
      %p120 = por %p118, %p119
      %s121 = ssub.s32 %s35, %s42
      %p122 = scmp.eq.s32.totalorder %s121, 0
      %s124 = sadd.s32 %s123, 1
      %s125 = scalar_select %p122, %s123, %s124
      %p128 = pneg %p122
      %p129 = scmp.eq.s32.totalorder %s35, 1
      %p130 = por %p128, %p129
      %p131 = scmp.ne.s32.totalorder %s123, %s126
      %p132 = scmp.eq.s32.totalorder %s35, 0
      %p133 = por %p131, %p132
      %p134 = scmp.ne.s32.totalorder %s123, %s126
      %p135 = scmp.eq.s32.totalorder %s40, 1
      %p136 = por %p134, %p135
      %p137 = scmp.ne.s32.totalorder %s126, %s127
      %p138 = scmp.eq.s32.totalorder %s40, 0
      %p139 = por %p137, %p138
      %p140 = scmp.ne.s32.totalorder %s126, %s127
      %p141 = scmp.eq.s32.totalorder %s41, 1
      %p142 = por %p140, %p141
      %p144 = scmp.ne.s32.totalorder %s127, %s143
      %p145 = scmp.eq.s32.totalorder %s41, 0
      %p146 = por %p144, %p145
      %s147 = ssub.s32 %s35, %s42
      %p148 = scmp.eq.s32.totalorder %s147, 0
      %s150 = sadd.s32 %s149, 1
      %s151 = scalar_select %p148, %s149, %s150
      %p154 = pneg %p148
      %p155 = scmp.eq.s32.totalorder %s35, 1
      %p156 = por %p154, %p155
      %p157 = scmp.ne.s32.totalorder %s149, %s152
      %p158 = scmp.eq.s32.totalorder %s35, 0
      %p159 = por %p157, %p158
      %p160 = scmp.ne.s32.totalorder %s149, %s152
      %p161 = scmp.eq.s32.totalorder %s40, 1
      %p162 = por %p160, %p161
      %p163 = scmp.ne.s32.totalorder %s152, %s153
      %p164 = scmp.eq.s32.totalorder %s40, 0
      %p165 = por %p163, %p164
      %p166 = scmp.ne.s32.totalorder %s152, %s153
      %p167 = scmp.eq.s32.totalorder %s41, 1
      %p168 = por %p166, %p167
      %p170 = scmp.ne.s32.totalorder %s153, %s169
      %p171 = scmp.eq.s32.totalorder %s41, 0
      %p172 = por %p170, %p171
      %s174 = sadd.s32 %s173, 1
      %p177 = scmp.eq.s32.totalorder %s35, 1
      %p178 = scmp.ne.s32.totalorder %s173, %s175
      %p179 = scmp.eq.s32.totalorder %s35, 0
      %p180 = por %p178, %p179
      %p181 = scmp.ne.s32.totalorder %s173, %s175
      %p182 = scmp.eq.s32.totalorder %s40, 1
      %p183 = por %p181, %p182
      %p184 = scmp.ne.s32.totalorder %s175, %s176
      %p185 = scmp.eq.s32.totalorder %s40, 0
      %p186 = por %p184, %p185
      %p187 = scmp.ne.s32.totalorder %s175, %s176
      %p188 = scmp.eq.s32.totalorder %s41, 1
      %p189 = por %p187, %p188
      %p191 = scmp.ne.s32.totalorder %s176, %s190
      %p192 = scmp.eq.s32.totalorder %s41, 0
      %p193 = por %p191, %p192
      %s195 = sadd.s32 %s194, 1
      %p198 = scmp.eq.s32.totalorder %s35, 1
      %p199 = scmp.ne.s32.totalorder %s194, %s196
      %p200 = scmp.eq.s32.totalorder %s35, 0
      %p201 = por %p199, %p200
      %p202 = scmp.ne.s32.totalorder %s194, %s196
      %p203 = scmp.eq.s32.totalorder %s40, 1
      %p204 = por %p202, %p203
      %p205 = scmp.ne.s32.totalorder %s196, %s197
      %p206 = scmp.eq.s32.totalorder %s40, 0
      %p207 = por %p205, %p206
      %p208 = scmp.ne.s32.totalorder %s196, %s197
      %p209 = scmp.eq.s32.totalorder %s41, 1
      %p210 = por %p208, %p209
      %p212 = scmp.ne.s32.totalorder %s197, %s211
      %p213 = scmp.eq.s32.totalorder %s41, 0
      %p214 = por %p212, %p213
      %s216 = sadd.s32 %s215, 1
      %p219 = scmp.eq.s32.totalorder %s35, 1
      %p220 = scmp.ne.s32.totalorder %s215, %s217
      %p221 = scmp.eq.s32.totalorder %s35, 0
      %p222 = por %p220, %p221
      %p223 = scmp.ne.s32.totalorder %s215, %s217
      %p224 = scmp.eq.s32.totalorder %s40, 1
      %p225 = por %p223, %p224
      %p226 = scmp.ne.s32.totalorder %s217, %s218
      %p227 = scmp.eq.s32.totalorder %s40, 0
      %p228 = por %p226, %p227
      %p229 = scmp.ne.s32.totalorder %s217, %s218
      %p230 = scmp.eq.s32.totalorder %s41, 1
      %p231 = por %p229, %p230
      %p233 = scmp.ne.s32.totalorder %s218, %s232
      %p234 = scmp.eq.s32.totalorder %s41, 0
      %p235 = por %p233, %p234
      %s237 = sadd.s32 %s236, 1
      %p240 = scmp.eq.s32.totalorder %s35, 1
      %p241 = scmp.ne.s32.totalorder %s236, %s238
      %p242 = scmp.eq.s32.totalorder %s35, 0
      %p243 = por %p241, %p242
      %p244 = scmp.ne.s32.totalorder %s236, %s238
      %p245 = scmp.eq.s32.totalorder %s40, 1
      %p246 = por %p244, %p245
      %p247 = scmp.ne.s32.totalorder %s238, %s239
      %p248 = scmp.eq.s32.totalorder %s40, 0
      %p249 = por %p247, %p248
      %p250 = scmp.ne.s32.totalorder %s238, %s239
      %p251 = scmp.eq.s32.totalorder %s41, 1
      %p252 = por %p250, %p251
      %p254 = scmp.ne.s32.totalorder %s239, %s253
      %p255 = scmp.eq.s32.totalorder %s41, 0
      %p256 = por %p254, %p255
      %s258 = sadd.s32 %s257, 1
      %p261 = scmp.eq.s32.totalorder %s35, 1
      %p262 = scmp.ne.s32.totalorder %s257, %s259
      %p263 = scmp.eq.s32.totalorder %s35, 0
      %p264 = por %p262, %p263
      %p265 = scmp.ne.s32.totalorder %s257, %s259
      %p266 = scmp.eq.s32.totalorder %s40, 1
      %p267 = por %p265, %p266
      %p268 = scmp.ne.s32.totalorder %s259, %s260
      %p269 = scmp.eq.s32.totalorder %s40, 0
      %p270 = por %p268, %p269
      %p271 = scmp.ne.s32.totalorder %s259, %s260
      %p272 = scmp.eq.s32.totalorder %s41, 1
      %p273 = por %p271, %p272
      %p275 = scmp.ne.s32.totalorder %s260, %s274
      %p276 = scmp.eq.s32.totalorder %s41, 0
      %p277 = por %p275, %p276
      %s279 = sadd.s32 %s278, 1
      %p282 = scmp.eq.s32.totalorder %s35, 1
      %p283 = scmp.ne.s32.totalorder %s278, %s280
      %p284 = scmp.eq.s32.totalorder %s35, 0
      %p285 = por %p283, %p284
      %p286 = scmp.ne.s32.totalorder %s278, %s280
      %p287 = scmp.eq.s32.totalorder %s40, 1
      %p288 = por %p286, %p287
      %p289 = scmp.ne.s32.totalorder %s280, %s281
      %p290 = scmp.eq.s32.totalorder %s40, 0
      %p291 = por %p289, %p290
      %p292 = scmp.ne.s32.totalorder %s280, %s281
      %p293 = scmp.eq.s32.totalorder %s41, 1
      %p294 = por %p292, %p293
      %p296 = scmp.ne.s32.totalorder %s281, %s295
      %p297 = scmp.eq.s32.totalorder %s41, 0
      %p298 = por %p296, %p297
      %s300 = sadd.s32 %s299, 1
      %p303 = scmp.eq.s32.totalorder %s35, 1
      %p304 = scmp.ne.s32.totalorder %s299, %s301
      %p305 = scmp.eq.s32.totalorder %s35, 0
      %p306 = por %p304, %p305
      %p307 = scmp.ne.s32.totalorder %s299, %s301
      %p308 = scmp.eq.s32.totalorder %s40, 1
      %p309 = por %p307, %p308
      %p310 = scmp.ne.s32.totalorder %s301, %s302
      %p311 = scmp.eq.s32.totalorder %s40, 0
      %p312 = por %p310, %p311
      %p313 = scmp.ne.s32.totalorder %s301, %s302
      %p314 = scmp.eq.s32.totalorder %s41, 1
      %p315 = por %p313, %p314
      %p317 = scmp.ne.s32.totalorder %s302, %s316
      %p318 = scmp.eq.s32.totalorder %s41, 0
      %p319 = por %p317, %p318
      %s321 = sadd.s32 %s320, 1
      %p324 = scmp.eq.s32.totalorder %s35, 1
      %p325 = scmp.ne.s32.totalorder %s320, %s322
      %p326 = scmp.eq.s32.totalorder %s35, 0
      %p327 = por %p325, %p326
      %p328 = scmp.ne.s32.totalorder %s320, %s322
      %p329 = scmp.eq.s32.totalorder %s40, 1
      %p330 = por %p328, %p329
      %p331 = scmp.ne.s32.totalorder %s322, %s323
      %p332 = scmp.eq.s32.totalorder %s40, 0
      %p333 = por %p331, %p332
      %p334 = scmp.ne.s32.totalorder %s322, %s323
      %p335 = scmp.eq.s32.totalorder %s41, 1
      %p336 = por %p334, %p335
      %p338 = scmp.ne.s32.totalorder %s323, %s337
      %p339 = scmp.eq.s32.totalorder %s41, 0
      %p340 = por %p338, %p339
      %s341 = ssub.s32 %s35, %s42
      %p342 = scmp.eq.s32.totalorder %s341, 0
      %s344 = sadd.s32 %s343, 1
      %s345 = scalar_select %p342, %s343, %s344
      %p348 = pneg %p342
      %p349 = scmp.eq.s32.totalorder %s35, 1
      %p350 = por %p348, %p349
      %p351 = scmp.ne.s32.totalorder %s343, %s346
      %p352 = scmp.eq.s32.totalorder %s35, 0
      %p353 = por %p351, %p352
      %p354 = scmp.ne.s32.totalorder %s343, %s346
      %p355 = scmp.eq.s32.totalorder %s40, 1
      %p356 = por %p354, %p355
      %p357 = scmp.ne.s32.totalorder %s346, %s347
      %p358 = scmp.eq.s32.totalorder %s40, 0
      %p359 = por %p357, %p358
      %p360 = scmp.ne.s32.totalorder %s346, %s347
      %p361 = scmp.eq.s32.totalorder %s41, 1
      %p362 = por %p360, %p361
      %p364 = scmp.ne.s32.totalorder %s347, %s363
      %p365 = scmp.eq.s32.totalorder %s41, 0
      %p366 = por %p364, %p365
      %p367 = scmp.le.s32.totalorder 1, %s35
      %p368 = scmp.lt.s32.totalorder %s35, 3
      %p369 = pnand %p367, %p368
      %p370 = pneg %p369
      // Predicated region
      $region9: #{tpu_custom_call.1} parent=5 // pred_check
        _
      $region10: #{tpu_custom_call.1} parent=5 // pred_check_branch
        %372 = sbr.rel (%p369) target = $region12
      $region11: #{tpu_custom_call.1} parent=5 // pred_region
        %s373 = ssub.s32 %s35, 1
        // Predicated region
        $region13: #{tpu_custom_call.1} parent=11 // pred_check
          %p374 = pneg %p186
        $region14: #{tpu_custom_call.1} parent=11 // pred_check_branch
          %376 = sbr.rel (%p374) target = $region16
        $region15: #{tpu_custom_call.1} parent=11 // pred_region
          %s378 = ssub.s32 256, 256
          %379 = vsyncadd [#allocation12], %s378
          %s380 = sshll.u32 [#allocation11], 4
          %s381 = int_to_ptr.vmem [resolvable:$true] %s380
          %386 = dma.hbm_to_vmem [thread:$0]  %s5, 256, %s381, [#allocation12], 128, 128, 8
        $region16: #{tpu_custom_call.1} parent=11 // pred_fallthru
          _
        // Predicated region
        $region17: #{tpu_custom_call.1} parent=11 // pred_check
          %p387 = pneg %p207
        $region18: #{tpu_custom_call.1} parent=11 // pred_check_branch
          %389 = sbr.rel (%p387) target = $region20
        $region19: #{tpu_custom_call.1} parent=11 // pred_region
          %s391 = ssub.s32 256, 256
          %392 = vsyncadd [#allocation12], %s391
          %s393 = sshll.u32 [#allocation13], 4
          %s394 = int_to_ptr.vmem [resolvable:$true] %s393
          %399 = dma.hbm_to_vmem [thread:$0]  %s6, 256, %s394, [#allocation12], 128, 128, 8
        $region20: #{tpu_custom_call.1} parent=11 // pred_fallthru
          _
        // Predicated region
        $region21: #{tpu_custom_call.1} parent=11 // pred_check
          %p400 = pneg %p228
        $region22: #{tpu_custom_call.1} parent=11 // pred_check_branch
          %402 = sbr.rel (%p400) target = $region24
        $region23: #{tpu_custom_call.1} parent=11 // pred_region
          %s404 = ssub.s32 256, 256
          %405 = vsyncadd [#allocation15], %s404
          %s406 = sshll.u32 [#allocation14], 4
          %s407 = int_to_ptr.vmem [resolvable:$true] %s406
          %412 = dma.hbm_to_vmem [thread:$0]  %s7, 256, %s407, [#allocation15], 128, 128, 8
        $region24: #{tpu_custom_call.1} parent=11 // pred_fallthru
          _
        // Predicated region
        $region25: #{tpu_custom_call.1} parent=11 // pred_check
          %p413 = pneg %p249
        $region26: #{tpu_custom_call.1} parent=11 // pred_check_branch
          %415 = sbr.rel (%p413) target = $region28
        $region27: #{tpu_custom_call.1} parent=11 // pred_region
          %s417 = ssub.s32 256, 256
          %418 = vsyncadd [#allocation15], %s417
          %s419 = sshll.u32 [#allocation16], 4
          %s420 = int_to_ptr.vmem [resolvable:$true] %s419
          %425 = dma.hbm_to_vmem [thread:$0]  %s8, 256, %s420, [#allocation15], 128, 128, 8
        $region28: #{tpu_custom_call.1} parent=11 // pred_fallthru
          _
        // Predicated region
        $region29: #{tpu_custom_call.1} parent=11 // pred_check
          %p426 = pneg %p270
        $region30: #{tpu_custom_call.1} parent=11 // pred_check_branch
          %428 = sbr.rel (%p426) target = $region32
        $region31: #{tpu_custom_call.1} parent=11 // pred_region
          _
        $region32: #{tpu_custom_call.1} parent=11 // pred_fallthru
          _
        // Predicated region
        $region33: #{tpu_custom_call.1} parent=11 // pred_check
          %p429 = pneg %p291
        $region34: #{tpu_custom_call.1} parent=11 // pred_check_branch
          %431 = sbr.rel (%p429) target = $region36
        $region35: #{tpu_custom_call.1} parent=11 // pred_region
          %s433 = ssub.s32 256, 256
          %434 = vsyncadd [#allocation18], %s433
          %s435 = sshll.u32 [#allocation17], 4
          %s436 = int_to_ptr.vmem [resolvable:$true] %s435
          %441 = dma.hbm_to_vmem [thread:$0]  %s10, 256, %s436, [#allocation18], 128, 128, 8
        $region36: #{tpu_custom_call.1} parent=11 // pred_fallthru
          _
        // Predicated region
        $region37: #{tpu_custom_call.1} parent=11 // pred_check
          %p442 = pneg %p312
        $region38: #{tpu_custom_call.1} parent=11 // pred_check_branch
          %444 = sbr.rel (%p442) target = $region40
        $region39: #{tpu_custom_call.1} parent=11 // pred_region
          %s446 = ssub.s32 256, 256
          %447 = vsyncadd [#allocation18], %s446
          %s448 = sshll.u32 [#allocation19], 4
          %s449 = int_to_ptr.vmem [resolvable:$true] %s448
          %454 = dma.hbm_to_vmem [thread:$0]  %s11, 256, %s449, [#allocation18], 128, 128, 8
        $region40: #{tpu_custom_call.1} parent=11 // pred_fallthru
          _
        // Predicated region
        $region41: #{tpu_custom_call.1} parent=11 // pred_check
          %p455 = pneg %p333
        $region42: #{tpu_custom_call.1} parent=11 // pred_check_branch
          %457 = sbr.rel (%p455) target = $region44
        $region43: #{tpu_custom_call.1} parent=11 // pred_region
          %s459 = ssub.s32 256, 256
          %460 = vsyncadd [#allocation21], %s459
          %s461 = sshll.u32 [#allocation20], 4
          %s462 = int_to_ptr.vmem [resolvable:$true] %s461
          %467 = dma.hbm_to_vmem [thread:$0]  %s12, 256, %s462, [#allocation21], 128, 128, 8
        $region44: #{tpu_custom_call.1} parent=11 // pred_fallthru
          _
      $region12: #{tpu_custom_call.1} parent=5 // pred_fallthru
        _
      %p468 = scmp.lt.s32.totalorder %s35, 2
      // Predicated region
      $region45: #{tpu_custom_call.1} parent=5 // pred_check
        %p469 = pneg %p468
      $region46: #{tpu_custom_call.1} parent=5 // pred_check_branch
        %471 = sbr.rel (%p469) target = $region48
      $region47: #{tpu_custom_call.1} parent=5 // pred_region
        // Predicated region
        $region49: #{tpu_custom_call.1} parent=47 // pred_check
          %p472 = pneg %p55
        $region50: #{tpu_custom_call.1} parent=47 // pred_check_branch
          %474 = sbr.rel (%p472) target = $region52
        $region51: #{tpu_custom_call.1} parent=47 // pred_region
          %s475 = sand.u32 %s45, 1
          %s476 = scalar_lea.sflag [#allocation3], %s475
          %s477 = sand.u32 %s45, 1
          %s478 = smul.addr %s477, 16
          %s479 = scalar_lea.vmem [#allocation2], %s478
          %s481 = ssub.s32 256, 256
          %482 = vsyncadd %s476, %s481
          %s483 = smul.addr %s35, 2
          %s484 = smul.addr %s483, 128
          %s485 = scalar_lea.hbm %s0, %s484
          %s486 = sshll.u32 %s479, 4
          %s487 = int_to_ptr.vmem [resolvable:$true] %s486
          %492 = dma.hbm_to_vmem [thread:$0]  %s485, 256, %s487, %s476, 128, 128, 8
        $region52: #{tpu_custom_call.1} parent=47 // pred_fallthru
          _
        // Predicated region
        $region53: #{tpu_custom_call.1} parent=47 // pred_check
          %p493 = pneg %p81
        $region54: #{tpu_custom_call.1} parent=47 // pred_check_branch
          %495 = sbr.rel (%p493) target = $region56
        $region55: #{tpu_custom_call.1} parent=47 // pred_region
          %s496 = sand.u32 %s35, 1
          %s497 = scalar_lea.sflag [#allocation6], %s496
          %s498 = sand.u32 %s71, 1
          %s499 = smul.addr %s498, 16
          %s500 = scalar_lea.vmem [#allocation5], %s499
          %s502 = ssub.s32 256, 256
          %503 = vsyncadd %s497, %s502
          %s504 = smul.addr %s35, 2
          %s505 = smul.addr %s504, 128
          %s506 = scalar_lea.hbm %s1, %s505
          %s507 = sshll.u32 %s500, 4
          %s508 = int_to_ptr.vmem [resolvable:$true] %s507
          %513 = dma.hbm_to_vmem [thread:$0]  %s506, 256, %s508, %s497, 128, 128, 8
        $region56: #{tpu_custom_call.1} parent=47 // pred_fallthru
          _
        // Predicated region
        $region57: #{tpu_custom_call.1} parent=47 // pred_check
          %p514 = pneg %p107
        $region58: #{tpu_custom_call.1} parent=47 // pred_check_branch
          %516 = sbr.rel (%p514) target = $region60
        $region59: #{tpu_custom_call.1} parent=47 // pred_region
          %s517 = sand.u32 %s35, 1
          %s518 = scalar_lea.sflag [#allocation6], %s517
          %s519 = sand.u32 %s97, 1
          %s520 = smul.addr %s519, 16
          %s521 = scalar_lea.vmem [#allocation7], %s520
          %s523 = ssub.s32 256, 256
          %524 = vsyncadd %s518, %s523
          %s525 = smul.addr %s35, 2
          %s526 = smul.addr %s525, 128
          %s527 = scalar_lea.hbm %s2, %s526
          %s528 = sshll.u32 %s521, 4
          %s529 = int_to_ptr.vmem [resolvable:$true] %s528
          %534 = dma.hbm_to_vmem [thread:$0]  %s527, 256, %s529, %s518, 128, 128, 8
        $region60: #{tpu_custom_call.1} parent=47 // pred_fallthru
          _
        // Predicated region
        $region61: #{tpu_custom_call.1} parent=47 // pred_check
          %p535 = pneg %p133
        $region62: #{tpu_custom_call.1} parent=47 // pred_check_branch
          %537 = sbr.rel (%p535) target = $region64
        $region63: #{tpu_custom_call.1} parent=47 // pred_region
          %s538 = sand.u32 %s35, 1
          %s539 = scalar_lea.sflag [#allocation9], %s538
          %s540 = sand.u32 %s123, 1
          %s541 = smul.addr %s540, 16
          %s542 = scalar_lea.vmem [#allocation8], %s541
          %s544 = ssub.s32 256, 256
          %545 = vsyncadd %s539, %s544
          %s546 = smul.addr %s35, 2
          %s547 = smul.addr %s546, 128
          %s548 = scalar_lea.hbm %s3, %s547
          %s549 = sshll.u32 %s542, 4
          %s550 = int_to_ptr.vmem [resolvable:$true] %s549
          %555 = dma.hbm_to_vmem [thread:$0]  %s548, 256, %s550, %s539, 128, 128, 8
        $region64: #{tpu_custom_call.1} parent=47 // pred_fallthru
          _
        // Predicated region
        $region65: #{tpu_custom_call.1} parent=47 // pred_check
          %p556 = pneg %p159
        $region66: #{tpu_custom_call.1} parent=47 // pred_check_branch
          %558 = sbr.rel (%p556) target = $region68
        $region67: #{tpu_custom_call.1} parent=47 // pred_region
          %s559 = sand.u32 %s35, 1
          %s560 = scalar_lea.sflag [#allocation9], %s559
          %s561 = sand.u32 %s149, 1
          %s562 = smul.addr %s561, 16
          %s563 = scalar_lea.vmem [#allocation10], %s562
          %s565 = ssub.s32 256, 256
          %566 = vsyncadd %s560, %s565
          %s567 = smul.addr %s35, 2
          %s568 = smul.addr %s567, 128
          %s569 = scalar_lea.hbm %s4, %s568
          %s570 = sshll.u32 %s563, 4
          %s571 = int_to_ptr.vmem [resolvable:$true] %s570
          %576 = dma.hbm_to_vmem [thread:$0]  %s569, 256, %s571, %s560, 128, 128, 8
        $region68: #{tpu_custom_call.1} parent=47 // pred_fallthru
          _
      $region48: #{tpu_custom_call.1} parent=5 // pred_fallthru
        _
      %p577 = scmp.le.s32.totalorder 1, %s35
      %p578 = scmp.lt.s32.totalorder %s35, 3
      %p579 = pnand %p577, %p578
      %p580 = pneg %p579
      // Predicated region
      $region69: #{tpu_custom_call.1} parent=5 // pred_check
        _
      $region70: #{tpu_custom_call.1} parent=5 // pred_check_branch
        %582 = sbr.rel (%p579) target = $region72
      $region71: #{tpu_custom_call.1} parent=5 // pred_region
        %s583 = ssub.s32 %s35, 1
        %s584 = sand.u32 %s48, 1
        %s585 = scalar_lea.sflag [#allocation3], %s584
        %s586 = sand.u32 %s48, 1
        %s587 = smul.addr %s586, 16
        %s588 = scalar_lea.vmem [#allocation2], %s587
        // Predicated region
        $region73: #{tpu_custom_call.1} parent=71 // pred_check
          %p589 = pneg %p61
        $region74: #{tpu_custom_call.1} parent=71 // pred_check_branch
          %591 = sbr.rel (%p589) target = $region76
        $region75: #{tpu_custom_call.1} parent=71 // pred_region
          %592 = dma.done %s585, 256
        $region76: #{tpu_custom_call.1} parent=71 // pred_fallthru
          _
        %s593 = sand.u32 %s40, 1
        %s594 = scalar_lea.sflag [#allocation6], %s593
        %s595 = sand.u32 %s74, 1
        %s596 = smul.addr %s595, 16
        %s597 = scalar_lea.vmem [#allocation5], %s596
        // Predicated region
        $region77: #{tpu_custom_call.1} parent=71 // pred_check
          %p598 = pneg %p87
        $region78: #{tpu_custom_call.1} parent=71 // pred_check_branch
          %600 = sbr.rel (%p598) target = $region80
        $region79: #{tpu_custom_call.1} parent=71 // pred_region
          %601 = dma.done %s594, 256
        $region80: #{tpu_custom_call.1} parent=71 // pred_fallthru
          _
        %s602 = sand.u32 %s40, 1
        %s603 = scalar_lea.sflag [#allocation6], %s602
        %s604 = sand.u32 %s100, 1
        %s605 = smul.addr %s604, 16
        %s606 = scalar_lea.vmem [#allocation7], %s605
        // Predicated region
        $region81: #{tpu_custom_call.1} parent=71 // pred_check
          %p607 = pneg %p113
        $region82: #{tpu_custom_call.1} parent=71 // pred_check_branch
          %609 = sbr.rel (%p607) target = $region84
        $region83: #{tpu_custom_call.1} parent=71 // pred_region
          %610 = dma.done %s603, 256
        $region84: #{tpu_custom_call.1} parent=71 // pred_fallthru
          _
        %s611 = sand.u32 %s40, 1
        %s612 = scalar_lea.sflag [#allocation9], %s611
        %s613 = sand.u32 %s126, 1
        %s614 = smul.addr %s613, 16
        %s615 = scalar_lea.vmem [#allocation8], %s614
        // Predicated region
        $region85: #{tpu_custom_call.1} parent=71 // pred_check
          %p616 = pneg %p139
        $region86: #{tpu_custom_call.1} parent=71 // pred_check_branch
          %618 = sbr.rel (%p616) target = $region88
        $region87: #{tpu_custom_call.1} parent=71 // pred_region
          %619 = dma.done %s612, 256
        $region88: #{tpu_custom_call.1} parent=71 // pred_fallthru
          _
        %s620 = sand.u32 %s40, 1
        %s621 = scalar_lea.sflag [#allocation9], %s620
        %s622 = sand.u32 %s152, 1
        %s623 = smul.addr %s622, 16
        %s624 = scalar_lea.vmem [#allocation10], %s623
        // Predicated region
        $region89: #{tpu_custom_call.1} parent=71 // pred_check
          %p625 = pneg %p165
        $region90: #{tpu_custom_call.1} parent=71 // pred_check_branch
          %627 = sbr.rel (%p625) target = $region92
        $region91: #{tpu_custom_call.1} parent=71 // pred_region
          %628 = dma.done %s621, 256
        $region92: #{tpu_custom_call.1} parent=71 // pred_fallthru
          _
        // Predicated region
        $region93: #{tpu_custom_call.1} parent=71 // pred_check
          %p629 = pneg %p186
        $region94: #{tpu_custom_call.1} parent=71 // pred_check_branch
          %631 = sbr.rel (%p629) target = $region96
        $region95: #{tpu_custom_call.1} parent=71 // pred_region
          %632 = dma.done [#allocation12], 256
        $region96: #{tpu_custom_call.1} parent=71 // pred_fallthru
          _
        // Predicated region
        $region97: #{tpu_custom_call.1} parent=71 // pred_check
          %p633 = pneg %p207
        $region98: #{tpu_custom_call.1} parent=71 // pred_check_branch
          %635 = sbr.rel (%p633) target = $region100
        $region99: #{tpu_custom_call.1} parent=71 // pred_region
          %636 = dma.done [#allocation12], 256
        $region100: #{tpu_custom_call.1} parent=71 // pred_fallthru
          _
        // Predicated region
        $region101: #{tpu_custom_call.1} parent=71 // pred_check
          %p637 = pneg %p228
        $region102: #{tpu_custom_call.1} parent=71 // pred_check_branch
          %639 = sbr.rel (%p637) target = $region104
        $region103: #{tpu_custom_call.1} parent=71 // pred_region
          %640 = dma.done [#allocation15], 256
        $region104: #{tpu_custom_call.1} parent=71 // pred_fallthru
          _
        // Predicated region
        $region105: #{tpu_custom_call.1} parent=71 // pred_check
          %p641 = pneg %p249
        $region106: #{tpu_custom_call.1} parent=71 // pred_check_branch
          %643 = sbr.rel (%p641) target = $region108
        $region107: #{tpu_custom_call.1} parent=71 // pred_region
          %644 = dma.done [#allocation15], 256
        $region108: #{tpu_custom_call.1} parent=71 // pred_fallthru
          _
        // Predicated region
        $region109: #{tpu_custom_call.1} parent=71 // pred_check
          %p645 = pneg %p291
        $region110: #{tpu_custom_call.1} parent=71 // pred_check_branch
          %647 = sbr.rel (%p645) target = $region112
        $region111: #{tpu_custom_call.1} parent=71 // pred_region
          %648 = dma.done [#allocation18], 256
        $region112: #{tpu_custom_call.1} parent=71 // pred_fallthru
          _
        // Predicated region
        $region113: #{tpu_custom_call.1} parent=71 // pred_check
          %p649 = pneg %p312
        $region114: #{tpu_custom_call.1} parent=71 // pred_check_branch
          %651 = sbr.rel (%p649) target = $region116
        $region115: #{tpu_custom_call.1} parent=71 // pred_region
          %652 = dma.done [#allocation18], 256
        $region116: #{tpu_custom_call.1} parent=71 // pred_fallthru
          _
        // Predicated region
        $region117: #{tpu_custom_call.1} parent=71 // pred_check
          %p653 = pneg %p333
        $region118: #{tpu_custom_call.1} parent=71 // pred_check_branch
          %655 = sbr.rel (%p653) target = $region120
        $region119: #{tpu_custom_call.1} parent=71 // pred_region
          %656 = dma.done [#allocation21], 256
        $region120: #{tpu_custom_call.1} parent=71 // pred_fallthru
          _
        %s657 = sand.u32 %s48, 1
        %s658 = scalar_lea.sflag [#allocation3], %s657
        %s659 = sand.u32 %s48, 1
        %s660 = smul.addr %s659, 16
        %s661 = scalar_lea.vmem [#allocation2], %s660
        %p662 = pneg %p61
        %p663 = pneg %p58
        %s664 = sand.u32 %s40, 1
        %s665 = scalar_lea.sflag [#allocation6], %s664
        %s666 = sand.u32 %s74, 1
        %s667 = smul.addr %s666, 16
        %s668 = scalar_lea.vmem [#allocation5], %s667
        %p669 = pneg %p87
        %p670 = pneg %p84
        %s671 = sand.u32 %s40, 1
        %s672 = scalar_lea.sflag [#allocation6], %s671
        %s673 = sand.u32 %s100, 1
        %s674 = smul.addr %s673, 16
        %s675 = scalar_lea.vmem [#allocation7], %s674
        %p676 = pneg %p113
        %p677 = pneg %p110
        %s678 = sand.u32 %s40, 1
        %s679 = scalar_lea.sflag [#allocation9], %s678
        %s680 = sand.u32 %s126, 1
        %s681 = smul.addr %s680, 16
        %s682 = scalar_lea.vmem [#allocation8], %s681
        %p683 = pneg %p139
        %p684 = pneg %p136
        %s685 = sand.u32 %s40, 1
        %s686 = scalar_lea.sflag [#allocation9], %s685
        %s687 = sand.u32 %s152, 1
        %s688 = smul.addr %s687, 16
        %s689 = scalar_lea.vmem [#allocation10], %s688
        %p690 = pneg %p165
        %p691 = pneg %p162
        %p692 = pneg %p186
        %p693 = pneg %p183
        %p694 = pneg %p207
        %p695 = pneg %p204
        %p696 = pneg %p228
        %p697 = pneg %p225
        %p698 = pneg %p249
        %p699 = pneg %p246
        %p700 = pneg %p270
        %p701 = pneg %p267
        %p702 = pneg %p291
        %p703 = pneg %p288
        %p704 = pneg %p312
        %p705 = pneg %p309
        %p706 = pneg %p333
        %p707 = pneg %p330
        %p708 = pneg %p359
        %p709 = pneg %p356
        %s710 = sand.u32 %s346, 1
        %s711 = scalar_lea.sflag [#allocation4], %s710
        %s712 = sand.u32 %s346, 1
        %s713 = smul.addr %s712, 32
        %s714 = scalar_lea.vmem [#allocation22], %s713
        %v715 = vld [vmem:[#allocation11] sm:$0xff]
        %v716 = vld [vmem:[#allocation11 + $0x8] sm:$0xff]
        %v717 = vld [vmem:[#allocation13] sm:$0xff]
        %v718 = vld [vmem:[#allocation13 + $0x8] sm:$0xff]
        %v719 = vld [vmem:[%s9] sm:$0xff]
        %v720 = vld [vmem:[%s9 + $0x8] sm:$0xff]
        %v721 = vld [vmem:[#allocation17] sm:$0xff]
        %v722 = vld [vmem:[#allocation17 + $0x8] sm:$0xff]
        %v723 = vld [vmem:[%s588] sm:$0xff]
        %v724 = vld [vmem:[%s588 + $0x8] sm:$0xff]
        %v725 = vld [vmem:[%s597] sm:$0xff]
        %v726 = vld [vmem:[%s597 + $0x8] sm:$0xff]
        %vm727 = vcmask 130048
        %v729 = vsel %vm727, %v723, 0
        %v732 = vsel %vm727, %v724, 0
        %734 = vmatprep.subr.mxu0 0.0
        %735 = vmatpush1.msra.mxu0 0.0
        %736 = vmatprep.subr.mxu0 0.0
        %737 = vmatpush1.msra.mxu0 0.0
        %738 = vmatprep.subr.mxu0 0.0
        %739 = vmatpush1.msra.mxu0 0.0
        %740 = vmatprep.subr.mxu0 0.0
        %741 = vmatpush1.msra.mxu0 0.0
        %742 = vmatprep.subr.mxu0 0.0
        %743 = vmatpush1.msra.mxu0 0.0
        %744 = vmatprep.subr.mxu0 0.0
        %745 = vmatpush1.msra.mxu0 0.0
        %746 = vmatprep.subr.mxu0 0.0
        %747 = vmatpush1.msra.mxu0 0.0
        %748 = vmatprep.subr.mxu0 0.0
        %749 = vmatpush1.msra.mxu0 0.0
        %750 = vmatprep.subr.mxu0 0.0
        %751 = vmatpush1.msra.mxu0 0.0
        %752 = vmatprep.subr.mxu0 0.0
        %753 = vmatpush1.msra.mxu0 0.0
        %754 = vmatprep.subr.mxu0 0.0
        %755 = vmatpush1.msra.mxu0 0.0
        %756 = vmatprep.subr.mxu0 0.0
        %757 = vmatpush1.msra.mxu0 0.0
        %758 = vmatprep.subr.mxu0 0.0
        %759 = vmatpush1.msra.mxu0 0.0
        %760 = vmatprep.subr.mxu0 0.0
        %761 = vmatpush1.msra.mxu0 0.0
        %762 = vmatprep.subr.mxu0 0.0
        %763 = vmatpush1.msra.mxu0 %v720
        %764 = vmatprep.subr.mxu0 0.0
        %765 = vmatpush1.msra.mxu0 %v719
        %766 = vmatprep.subr.mxu0 0.0
        %767 = vmatpush2.msra.mxu0 0.0
        %768 = vmatprep.subr.mxu0 0.0
        %769 = vmatpush2.msra.mxu0 0.0
        %770 = vmatprep.subr.mxu0 0.0
        %771 = vmatpush2.msra.mxu0 0.0
        %772 = vmatprep.subr.mxu0 0.0
        %773 = vmatpush2.msra.mxu0 0.0
        %774 = vmatprep.subr.mxu0 0.0
        %775 = vmatpush2.msra.mxu0 0.0
        %776 = vmatprep.subr.mxu0 0.0
        %777 = vmatpush2.msra.mxu0 0.0
        %778 = vmatprep.subr.mxu0 0.0
        %779 = vmatpush2.msra.mxu0 0.0
        %780 = vmatprep.subr.mxu0 0.0
        %781 = vmatpush2.msra.mxu0 0.0
        %782 = vmatprep.subr.mxu0 0.0
        %783 = vmatpush2.msra.mxu0 0.0
        %784 = vmatprep.subr.mxu0 0.0
        %785 = vmatpush2.msra.mxu0 0.0
        %786 = vmatprep.subr.mxu0 0.0
        %787 = vmatpush2.msra.mxu0 0.0
        %788 = vmatprep.subr.mxu0 0.0
        %789 = vmatpush2.msra.mxu0 0.0
        %790 = vmatprep.subr.mxu0 0.0
        %791 = vmatpush2.msra.mxu0 0.0
        %792 = vmatprep.subr.mxu0 0.0
        %793 = vmatpush2.msra.mxu0 0.0
        %794 = vmatprep.subr.mxu0 0.0
        %795 = vmatpush2.msra.mxu0 0.0
        %796 = vmatprep.subr.mxu0 0.0
        %797 = vmatpush2.msra.mxu0 0.0
        %798 = vmatprep.mubr.f32.mxu0 0.0
        %799 = vmatmul.mubr.f32.gmra.mxu0 %v729
        %v800 = vpop.f32.mrf.mxu0
        %v801 = vadd.f32 0.0, %v800
        %v802 = vpop.f32.mrf.mxu0
        %803 = vmatprep.mubr.f32.mxu0 0.0
        %804 = vmatmul.mubr.f32.gmra.mxu0 %v732
        %v805 = vpop.f32.mrf.mxu0
        %v806 = vadd.f32 0.0, %v805
        %v807 = vpop.f32.mrf.mxu0
        %808 = vdwg.mxu0
        %v810 = vsel %vm727, %v725, 0
        %v813 = vsel %vm727, %v726, 0
        %815 = vmatprep.subr.mxu0 0.0
        %816 = vmatpush1.msra.mxu0 0.0
        %817 = vmatprep.subr.mxu0 0.0
        %818 = vmatpush1.msra.mxu0 0.0
        %819 = vmatprep.subr.mxu0 0.0
        %820 = vmatpush1.msra.mxu0 0.0
        %821 = vmatprep.subr.mxu0 0.0
        %822 = vmatpush1.msra.mxu0 0.0
        %823 = vmatprep.subr.mxu0 0.0
        %824 = vmatpush1.msra.mxu0 0.0
        %825 = vmatprep.subr.mxu0 0.0
        %826 = vmatpush1.msra.mxu0 0.0
        %827 = vmatprep.subr.mxu0 0.0
        %828 = vmatpush1.msra.mxu0 0.0
        %829 = vmatprep.subr.mxu0 0.0
        %830 = vmatpush1.msra.mxu0 0.0
        %831 = vmatprep.subr.mxu0 0.0
        %832 = vmatpush1.msra.mxu0 0.0
        %833 = vmatprep.subr.mxu0 0.0
        %834 = vmatpush1.msra.mxu0 0.0
        %835 = vmatprep.subr.mxu0 0.0
        %836 = vmatpush1.msra.mxu0 0.0
        %837 = vmatprep.subr.mxu0 0.0
        %838 = vmatpush1.msra.mxu0 0.0
        %839 = vmatprep.subr.mxu0 0.0
        %840 = vmatpush1.msra.mxu0 0.0
        %841 = vmatprep.subr.mxu0 0.0
        %842 = vmatpush1.msra.mxu0 0.0
        %843 = vmatprep.subr.mxu0 0.0
        %844 = vmatpush1.msra.mxu0 %v722
        %845 = vmatprep.subr.mxu0 0.0
        %846 = vmatpush1.msra.mxu0 %v721
        %847 = vmatprep.subr.mxu0 0.0
        %848 = vmatpush2.msra.mxu0 0.0
        %849 = vmatprep.subr.mxu0 0.0
        %850 = vmatpush2.msra.mxu0 0.0
        %851 = vmatprep.subr.mxu0 0.0
        %852 = vmatpush2.msra.mxu0 0.0
        %853 = vmatprep.subr.mxu0 0.0
        %854 = vmatpush2.msra.mxu0 0.0
        %855 = vmatprep.subr.mxu0 0.0
        %856 = vmatpush2.msra.mxu0 0.0
        %857 = vmatprep.subr.mxu0 0.0
        %858 = vmatpush2.msra.mxu0 0.0
        %859 = vmatprep.subr.mxu0 0.0
        %860 = vmatpush2.msra.mxu0 0.0
        %861 = vmatprep.subr.mxu0 0.0
        %862 = vmatpush2.msra.mxu0 0.0
        %863 = vmatprep.subr.mxu0 0.0
        %864 = vmatpush2.msra.mxu0 0.0
        %865 = vmatprep.subr.mxu0 0.0
        %866 = vmatpush2.msra.mxu0 0.0
        %867 = vmatprep.subr.mxu0 0.0
        %868 = vmatpush2.msra.mxu0 0.0
        %869 = vmatprep.subr.mxu0 0.0
        %870 = vmatpush2.msra.mxu0 0.0
        %871 = vmatprep.subr.mxu0 0.0
        %872 = vmatpush2.msra.mxu0 0.0
        %873 = vmatprep.subr.mxu0 0.0
        %874 = vmatpush2.msra.mxu0 0.0
        %875 = vmatprep.subr.mxu0 0.0
        %876 = vmatpush2.msra.mxu0 0.0
        %877 = vmatprep.subr.mxu0 0.0
        %878 = vmatpush2.msra.mxu0 0.0
        %879 = vmatprep.mubr.f32.mxu0 0.0
        %880 = vmatmul.mubr.f32.gmra.mxu0 %v810
        %v881 = vpop.f32.mrf.mxu0
        %v882 = vadd.f32 0.0, %v881
        %v883 = vpop.f32.mrf.mxu0
        %884 = vmatprep.mubr.f32.mxu0 0.0
        %885 = vmatmul.mubr.f32.gmra.mxu0 %v813
        %v886 = vpop.f32.mrf.mxu0
        %v887 = vadd.f32 0.0, %v886
        %v888 = vpop.f32.mrf.mxu0
        %889 = vdwg.mxu0
        %v890 = vadd.f32 %v723, %v725
        %v891 = vadd.f32 %v724, %v726
        %v892 = vld [vmem:[#allocation19] sm:$0xff]
        %v893 = vld [vmem:[#allocation19 + $0x8] sm:$0xff]
        %v895 = vsel %vm727, %v890, 0
        %v898 = vsel %vm727, %v891, 0
        %900 = vmatprep.subr.mxu0 0.0
        %901 = vmatpush1.msra.mxu0 0.0
        %902 = vmatprep.subr.mxu0 0.0
        %903 = vmatpush1.msra.mxu0 0.0
        %904 = vmatprep.subr.mxu0 0.0
        %905 = vmatpush1.msra.mxu0 0.0
        %906 = vmatprep.subr.mxu0 0.0
        %907 = vmatpush1.msra.mxu0 0.0
        %908 = vmatprep.subr.mxu0 0.0
        %909 = vmatpush1.msra.mxu0 0.0
        %910 = vmatprep.subr.mxu0 0.0
        %911 = vmatpush1.msra.mxu0 0.0
        %912 = vmatprep.subr.mxu0 0.0
        %913 = vmatpush1.msra.mxu0 0.0
        %914 = vmatprep.subr.mxu0 0.0
        %915 = vmatpush1.msra.mxu0 0.0
        %916 = vmatprep.subr.mxu0 0.0
        %917 = vmatpush1.msra.mxu0 0.0
        %918 = vmatprep.subr.mxu0 0.0
        %919 = vmatpush1.msra.mxu0 0.0
        %920 = vmatprep.subr.mxu0 0.0
        %921 = vmatpush1.msra.mxu0 0.0
        %922 = vmatprep.subr.mxu0 0.0
        %923 = vmatpush1.msra.mxu0 0.0
        %924 = vmatprep.subr.mxu0 0.0
        %925 = vmatpush1.msra.mxu0 0.0
        %926 = vmatprep.subr.mxu0 0.0
        %927 = vmatpush1.msra.mxu0 0.0
        %928 = vmatprep.subr.mxu0 0.0
        %929 = vmatpush1.msra.mxu0 %v893
        %930 = vmatprep.subr.mxu0 0.0
        %931 = vmatpush1.msra.mxu0 %v892
        %932 = vmatprep.subr.mxu0 0.0
        %933 = vmatpush2.msra.mxu0 0.0
        %934 = vmatprep.subr.mxu0 0.0
        %935 = vmatpush2.msra.mxu0 0.0
        %936 = vmatprep.subr.mxu0 0.0
        %937 = vmatpush2.msra.mxu0 0.0
        %938 = vmatprep.subr.mxu0 0.0
        %939 = vmatpush2.msra.mxu0 0.0
        %940 = vmatprep.subr.mxu0 0.0
        %941 = vmatpush2.msra.mxu0 0.0
        %942 = vmatprep.subr.mxu0 0.0
        %943 = vmatpush2.msra.mxu0 0.0
        %944 = vmatprep.subr.mxu0 0.0
        %945 = vmatpush2.msra.mxu0 0.0
        %946 = vmatprep.subr.mxu0 0.0
        %947 = vmatpush2.msra.mxu0 0.0
        %948 = vmatprep.subr.mxu0 0.0
        %949 = vmatpush2.msra.mxu0 0.0
        %950 = vmatprep.subr.mxu0 0.0
        %951 = vmatpush2.msra.mxu0 0.0
        %952 = vmatprep.subr.mxu0 0.0
        %953 = vmatpush2.msra.mxu0 0.0
        %954 = vmatprep.subr.mxu0 0.0
        %955 = vmatpush2.msra.mxu0 0.0
        %956 = vmatprep.subr.mxu0 0.0
        %957 = vmatpush2.msra.mxu0 0.0
        %958 = vmatprep.subr.mxu0 0.0
        %959 = vmatpush2.msra.mxu0 0.0
        %960 = vmatprep.subr.mxu0 0.0
        %961 = vmatpush2.msra.mxu0 0.0
        %962 = vmatprep.subr.mxu0 0.0
        %963 = vmatpush2.msra.mxu0 0.0
        %964 = vmatprep.mubr.f32.mxu0 0.0
        %965 = vmatmul.mubr.f32.gmra.mxu0 %v895
        %v966 = vpop.f32.mrf.mxu0
        %v967 = vadd.f32 0.0, %v966
        %v968 = vpop.f32.mrf.mxu0
        %969 = vmatprep.mubr.f32.mxu0 0.0
        %970 = vmatmul.mubr.f32.gmra.mxu0 %v898
        %v971 = vpop.f32.mrf.mxu0
        %v972 = vadd.f32 0.0, %v971
        %v973 = vpop.f32.mrf.mxu0
        %974 = vdwg.mxu0
        %v975 = vsub.f32 %v801, %v882
        %v976 = vsub.f32 %v806, %v887
        %v977 = vsub.f32 %v967, %v801
        %v978 = vsub.f32 %v972, %v806
        %v979 = vsub.f32 %v977, %v882
        %v980 = vsub.f32 %v978, %v887
        %v982 = vsel %vm727, %v715, 0
        %v985 = vsel %vm727, %v716, 0
        %987 = vmatprep.subr.mxu0 0.0
        %988 = vmatpush1.msra.mxu0 0.0
        %989 = vmatprep.subr.mxu0 0.0
        %990 = vmatpush1.msra.mxu0 0.0
        %991 = vmatprep.subr.mxu0 0.0
        %992 = vmatpush1.msra.mxu0 0.0
        %993 = vmatprep.subr.mxu0 0.0
        %994 = vmatpush1.msra.mxu0 0.0
        %995 = vmatprep.subr.mxu0 0.0
        %996 = vmatpush1.msra.mxu0 0.0
        %997 = vmatprep.subr.mxu0 0.0
        %998 = vmatpush1.msra.mxu0 0.0
        %999 = vmatprep.subr.mxu0 0.0
        %1000 = vmatpush1.msra.mxu0 0.0
        %1001 = vmatprep.subr.mxu0 0.0
        %1002 = vmatpush1.msra.mxu0 0.0
        %1003 = vmatprep.subr.mxu0 0.0
        %1004 = vmatpush1.msra.mxu0 0.0
        %1005 = vmatprep.subr.mxu0 0.0
        %1006 = vmatpush1.msra.mxu0 0.0
        %1007 = vmatprep.subr.mxu0 0.0
        %1008 = vmatpush1.msra.mxu0 0.0
        %1009 = vmatprep.subr.mxu0 0.0
        %1010 = vmatpush1.msra.mxu0 0.0
        %1011 = vmatprep.subr.mxu0 0.0
        %1012 = vmatpush1.msra.mxu0 0.0
        %1013 = vmatprep.subr.mxu0 0.0
        %1014 = vmatpush1.msra.mxu0 0.0
        %1015 = vmatprep.subr.mxu0 0.0
        %1016 = vmatpush1.msra.mxu0 %v976
        %1017 = vmatprep.subr.mxu0 0.0
        %1018 = vmatpush1.msra.mxu0 %v975
        %1019 = vmatprep.subr.mxu0 0.0
        %1020 = vmatpush2.msra.mxu0 0.0
        %1021 = vmatprep.subr.mxu0 0.0
        %1022 = vmatpush2.msra.mxu0 0.0
        %1023 = vmatprep.subr.mxu0 0.0
        %1024 = vmatpush2.msra.mxu0 0.0
        %1025 = vmatprep.subr.mxu0 0.0
        %1026 = vmatpush2.msra.mxu0 0.0
        %1027 = vmatprep.subr.mxu0 0.0
        %1028 = vmatpush2.msra.mxu0 0.0
        %1029 = vmatprep.subr.mxu0 0.0
        %1030 = vmatpush2.msra.mxu0 0.0
        %1031 = vmatprep.subr.mxu0 0.0
        %1032 = vmatpush2.msra.mxu0 0.0
        %1033 = vmatprep.subr.mxu0 0.0
        %1034 = vmatpush2.msra.mxu0 0.0
        %1035 = vmatprep.subr.mxu0 0.0
        %1036 = vmatpush2.msra.mxu0 0.0
        %1037 = vmatprep.subr.mxu0 0.0
        %1038 = vmatpush2.msra.mxu0 0.0
        %1039 = vmatprep.subr.mxu0 0.0
        %1040 = vmatpush2.msra.mxu0 0.0
        %1041 = vmatprep.subr.mxu0 0.0
        %1042 = vmatpush2.msra.mxu0 0.0
        %1043 = vmatprep.subr.mxu0 0.0
        %1044 = vmatpush2.msra.mxu0 0.0
        %1045 = vmatprep.subr.mxu0 0.0
        %1046 = vmatpush2.msra.mxu0 0.0
        %1047 = vmatprep.subr.mxu0 0.0
        %1048 = vmatpush2.msra.mxu0 0.0
        %1049 = vmatprep.subr.mxu0 0.0
        %1050 = vmatpush2.msra.mxu0 0.0
        %1051 = vmatprep.mubr.f32.mxu0 0.0
        %1052 = vmatmul.mubr.f32.gmra.mxu0 %v982
        %v1053 = vpop.f32.mrf.mxu0
        %v1054 = vadd.f32 0.0, %v1053
        %v1055 = vpop.f32.mrf.mxu0
        %1056 = vmatprep.mubr.f32.mxu0 0.0
        %1057 = vmatmul.mubr.f32.gmra.mxu0 %v985
        %v1058 = vpop.f32.mrf.mxu0
        %v1059 = vadd.f32 0.0, %v1058
        %v1060 = vpop.f32.mrf.mxu0
        %1061 = vdwg.mxu0
        %v1063 = vsel %vm727, %v717, 0
        %v1066 = vsel %vm727, %v718, 0
        %1068 = vmatprep.subr.mxu0 0.0
        %1069 = vmatpush1.msra.mxu0 0.0
        %1070 = vmatprep.subr.mxu0 0.0
        %1071 = vmatpush1.msra.mxu0 0.0
        %1072 = vmatprep.subr.mxu0 0.0
        %1073 = vmatpush1.msra.mxu0 0.0
        %1074 = vmatprep.subr.mxu0 0.0
        %1075 = vmatpush1.msra.mxu0 0.0
        %1076 = vmatprep.subr.mxu0 0.0
        %1077 = vmatpush1.msra.mxu0 0.0
        %1078 = vmatprep.subr.mxu0 0.0
        %1079 = vmatpush1.msra.mxu0 0.0
        %1080 = vmatprep.subr.mxu0 0.0
        %1081 = vmatpush1.msra.mxu0 0.0
        %1082 = vmatprep.subr.mxu0 0.0
        %1083 = vmatpush1.msra.mxu0 0.0
        %1084 = vmatprep.subr.mxu0 0.0
        %1085 = vmatpush1.msra.mxu0 0.0
        %1086 = vmatprep.subr.mxu0 0.0
        %1087 = vmatpush1.msra.mxu0 0.0
        %1088 = vmatprep.subr.mxu0 0.0
        %1089 = vmatpush1.msra.mxu0 0.0
        %1090 = vmatprep.subr.mxu0 0.0
        %1091 = vmatpush1.msra.mxu0 0.0
        %1092 = vmatprep.subr.mxu0 0.0
        %1093 = vmatpush1.msra.mxu0 0.0
        %1094 = vmatprep.subr.mxu0 0.0
        %1095 = vmatpush1.msra.mxu0 0.0
        %1096 = vmatprep.subr.mxu0 0.0
        %1097 = vmatpush1.msra.mxu0 %v980
        %1098 = vmatprep.subr.mxu0 0.0
        %1099 = vmatpush1.msra.mxu0 %v979
        %1100 = vmatprep.subr.mxu0 0.0
        %1101 = vmatpush2.msra.mxu0 0.0
        %1102 = vmatprep.subr.mxu0 0.0
        %1103 = vmatpush2.msra.mxu0 0.0
        %1104 = vmatprep.subr.mxu0 0.0
        %1105 = vmatpush2.msra.mxu0 0.0
        %1106 = vmatprep.subr.mxu0 0.0
        %1107 = vmatpush2.msra.mxu0 0.0
        %1108 = vmatprep.subr.mxu0 0.0
        %1109 = vmatpush2.msra.mxu0 0.0
        %1110 = vmatprep.subr.mxu0 0.0
        %1111 = vmatpush2.msra.mxu0 0.0
        %1112 = vmatprep.subr.mxu0 0.0
        %1113 = vmatpush2.msra.mxu0 0.0
        %1114 = vmatprep.subr.mxu0 0.0
        %1115 = vmatpush2.msra.mxu0 0.0
        %1116 = vmatprep.subr.mxu0 0.0
        %1117 = vmatpush2.msra.mxu0 0.0
        %1118 = vmatprep.subr.mxu0 0.0
        %1119 = vmatpush2.msra.mxu0 0.0
        %1120 = vmatprep.subr.mxu0 0.0
        %1121 = vmatpush2.msra.mxu0 0.0
        %1122 = vmatprep.subr.mxu0 0.0
        %1123 = vmatpush2.msra.mxu0 0.0
        %1124 = vmatprep.subr.mxu0 0.0
        %1125 = vmatpush2.msra.mxu0 0.0
        %1126 = vmatprep.subr.mxu0 0.0
        %1127 = vmatpush2.msra.mxu0 0.0
        %1128 = vmatprep.subr.mxu0 0.0
        %1129 = vmatpush2.msra.mxu0 0.0
        %1130 = vmatprep.subr.mxu0 0.0
        %1131 = vmatpush2.msra.mxu0 0.0
        %1132 = vmatprep.mubr.f32.mxu0 0.0
        %1133 = vmatmul.mubr.f32.gmra.mxu0 %v1063
        %v1134 = vpop.f32.mrf.mxu0
        %v1135 = vadd.f32 0.0, %v1134
        %v1136 = vpop.f32.mrf.mxu0
        %1137 = vmatprep.mubr.f32.mxu0 0.0
        %1138 = vmatmul.mubr.f32.gmra.mxu0 %v1066
        %v1139 = vpop.f32.mrf.mxu0
        %v1140 = vadd.f32 0.0, %v1139
        %v1141 = vpop.f32.mrf.mxu0
        %1142 = vdwg.mxu0
        %v1143 = vld [vmem:[#allocation14] sm:$0xff]
        %v1144 = vld [vmem:[#allocation14 + $0x8] sm:$0xff]
        %v1145 = vadd.f32 %v975, %v979
        %v1146 = vadd.f32 %v976, %v980
        %v1148 = vsel %vm727, %v1143, 0
        %v1151 = vsel %vm727, %v1144, 0
        %1153 = vmatprep.subr.mxu0 0.0
        %1154 = vmatpush1.msra.mxu0 0.0
        %1155 = vmatprep.subr.mxu0 0.0
        %1156 = vmatpush1.msra.mxu0 0.0
        %1157 = vmatprep.subr.mxu0 0.0
        %1158 = vmatpush1.msra.mxu0 0.0
        %1159 = vmatprep.subr.mxu0 0.0
        %1160 = vmatpush1.msra.mxu0 0.0
        %1161 = vmatprep.subr.mxu0 0.0
        %1162 = vmatpush1.msra.mxu0 0.0
        %1163 = vmatprep.subr.mxu0 0.0
        %1164 = vmatpush1.msra.mxu0 0.0
        %1165 = vmatprep.subr.mxu0 0.0
        %1166 = vmatpush1.msra.mxu0 0.0
        %1167 = vmatprep.subr.mxu0 0.0
        %1168 = vmatpush1.msra.mxu0 0.0
        %1169 = vmatprep.subr.mxu0 0.0
        %1170 = vmatpush1.msra.mxu0 0.0
        %1171 = vmatprep.subr.mxu0 0.0
        %1172 = vmatpush1.msra.mxu0 0.0
        %1173 = vmatprep.subr.mxu0 0.0
        %1174 = vmatpush1.msra.mxu0 0.0
        %1175 = vmatprep.subr.mxu0 0.0
        %1176 = vmatpush1.msra.mxu0 0.0
        %1177 = vmatprep.subr.mxu0 0.0
        %1178 = vmatpush1.msra.mxu0 0.0
        %1179 = vmatprep.subr.mxu0 0.0
        %1180 = vmatpush1.msra.mxu0 0.0
        %1181 = vmatprep.subr.mxu0 0.0
        %1182 = vmatpush1.msra.mxu0 %v1146
        %1183 = vmatprep.subr.mxu0 0.0
        %1184 = vmatpush1.msra.mxu0 %v1145
        %1185 = vmatprep.subr.mxu0 0.0
        %1186 = vmatpush2.msra.mxu0 0.0
        %1187 = vmatprep.subr.mxu0 0.0
        %1188 = vmatpush2.msra.mxu0 0.0
        %1189 = vmatprep.subr.mxu0 0.0
        %1190 = vmatpush2.msra.mxu0 0.0
        %1191 = vmatprep.subr.mxu0 0.0
        %1192 = vmatpush2.msra.mxu0 0.0
        %1193 = vmatprep.subr.mxu0 0.0
        %1194 = vmatpush2.msra.mxu0 0.0
        %1195 = vmatprep.subr.mxu0 0.0
        %1196 = vmatpush2.msra.mxu0 0.0
        %1197 = vmatprep.subr.mxu0 0.0
        %1198 = vmatpush2.msra.mxu0 0.0
        %1199 = vmatprep.subr.mxu0 0.0
        %1200 = vmatpush2.msra.mxu0 0.0
        %1201 = vmatprep.subr.mxu0 0.0
        %1202 = vmatpush2.msra.mxu0 0.0
        %1203 = vmatprep.subr.mxu0 0.0
        %1204 = vmatpush2.msra.mxu0 0.0
        %1205 = vmatprep.subr.mxu0 0.0
        %1206 = vmatpush2.msra.mxu0 0.0
        %1207 = vmatprep.subr.mxu0 0.0
        %1208 = vmatpush2.msra.mxu0 0.0
        %1209 = vmatprep.subr.mxu0 0.0
        %1210 = vmatpush2.msra.mxu0 0.0
        %1211 = vmatprep.subr.mxu0 0.0
        %1212 = vmatpush2.msra.mxu0 0.0
        %1213 = vmatprep.subr.mxu0 0.0
        %1214 = vmatpush2.msra.mxu0 0.0
        %1215 = vmatprep.subr.mxu0 0.0
        %1216 = vmatpush2.msra.mxu0 0.0
        %1217 = vmatprep.mubr.f32.mxu0 0.0
        %1218 = vmatmul.mubr.f32.gmra.mxu0 %v1148
        %v1219 = vpop.f32.mrf.mxu0
        %v1220 = vadd.f32 0.0, %v1219
        %v1221 = vpop.f32.mrf.mxu0
        %1222 = vmatprep.mubr.f32.mxu0 0.0
        %1223 = vmatmul.mubr.f32.gmra.mxu0 %v1151
        %v1224 = vpop.f32.mrf.mxu0
        %v1225 = vadd.f32 0.0, %v1224
        %v1226 = vpop.f32.mrf.mxu0
        %1227 = vdwg.mxu0
        %v1228 = vsub.f32 %v1054, %v1135
        %v1229 = vsub.f32 %v1059, %v1140
        %v1230 = vsub.f32 %v1220, %v1054
        %v1231 = vsub.f32 %v1225, %v1059
        %v1232 = vsub.f32 %v1230, %v1135
        %v1233 = vsub.f32 %v1231, %v1140
        %v1234 = vld [vmem:[%s624] sm:$0xff]
        %v1235 = vld [vmem:[%s624 + $0x8] sm:$0xff]
        %v1236 = vld [vmem:[%s606] sm:$0xff]
        %v1237 = vld [vmem:[%s606 + $0x8] sm:$0xff]
        %v1238 = vsub.f32 %v1236, %v1228
        %v1239 = vsub.f32 %v1237, %v1229
        %v1240 = vmul.f32 %v1238, %v1234
        %v1241 = vmul.f32 %v1239, %v1235
        %v1242 = vadd.f32 %v1228, %v1240
        %v1243 = vadd.f32 %v1229, %v1241
        %v1244 = vld [vmem:[%s615] sm:$0xff]
        %v1245 = vld [vmem:[%s615 + $0x8] sm:$0xff]
        %v1246 = vsub.f32 %v1244, %v1232
        %v1247 = vsub.f32 %v1245, %v1233
        %v1248 = vmul.f32 %v1246, %v1234
        %v1249 = vmul.f32 %v1247, %v1235
        %v1250 = vadd.f32 %v1232, %v1248
        %v1251 = vadd.f32 %v1233, %v1249
        %1252 = vmatprep.subr.mxu0 0.0
        %1253 = vmatpush1.msra.mxu0 0.0
        %1254 = vmatprep.subr.mxu0 0.0
        %1255 = vmatpush1.msra.mxu0 0.0
        %1256 = vmatprep.subr.mxu0 0.0
        %1257 = vmatpush1.msra.mxu0 0.0
        %1258 = vmatprep.subr.mxu0 0.0
        %1259 = vmatpush1.msra.mxu0 0.0
        %1260 = vmatprep.subr.mxu0 0.0
        %1261 = vmatpush1.msra.mxu0 0.0
        %1262 = vmatprep.subr.mxu0 0.0
        %1263 = vmatpush1.msra.mxu0 0.0
        %1264 = vmatprep.subr.mxu0 0.0
        %1265 = vmatpush1.msra.mxu0 0.0
        %1266 = vmatprep.subr.mxu0 0.0
        %1267 = vmatpush1.msra.mxu0 0.0
        %1268 = vmatprep.subr.mxu0 0.0
        %1269 = vmatpush1.msra.mxu0 0.0
        %1270 = vmatprep.subr.mxu0 0.0
        %1271 = vmatpush1.msra.mxu0 0.0
        %1272 = vmatprep.subr.mxu0 0.0
        %1273 = vmatpush1.msra.mxu0 0.0
        %1274 = vmatprep.subr.mxu0 0.0
        %1275 = vmatpush1.msra.mxu0 0.0
        %1276 = vmatprep.subr.mxu0 0.0
        %1277 = vmatpush1.msra.mxu0 0.0
        %1278 = vmatprep.subr.mxu0 0.0
        %1279 = vmatpush1.msra.mxu0 0.0
        %1280 = vmatprep.subr.mxu0 0.0
        %1281 = vmatpush1.msra.mxu0 %v1243
        %1282 = vmatprep.subr.mxu0 0.0
        %1283 = vmatpush1.msra.mxu0 %v1242
        %1284 = vmatprep.subr.mxu0 0.0
        %1285 = vmatpush2.msra.mxu0 0.0
        %1286 = vmatprep.subr.mxu0 0.0
        %1287 = vmatpush2.msra.mxu0 0.0
        %1288 = vmatprep.subr.mxu0 0.0
        %1289 = vmatpush2.msra.mxu0 0.0
        %1290 = vmatprep.subr.mxu0 0.0
        %1291 = vmatpush2.msra.mxu0 0.0
        %1292 = vmatprep.subr.mxu0 0.0
        %1293 = vmatpush2.msra.mxu0 0.0
        %1294 = vmatprep.subr.mxu0 0.0
        %1295 = vmatpush2.msra.mxu0 0.0
        %1296 = vmatprep.subr.mxu0 0.0
        %1297 = vmatpush2.msra.mxu0 0.0
        %1298 = vmatprep.subr.mxu0 0.0
        %1299 = vmatpush2.msra.mxu0 0.0
        %1300 = vmatprep.subr.mxu0 0.0
        %1301 = vmatpush2.msra.mxu0 0.0
        %1302 = vmatprep.subr.mxu0 0.0
        %1303 = vmatpush2.msra.mxu0 0.0
        %1304 = vmatprep.subr.mxu0 0.0
        %1305 = vmatpush2.msra.mxu0 0.0
        %1306 = vmatprep.subr.mxu0 0.0
        %1307 = vmatpush2.msra.mxu0 0.0
        %1308 = vmatprep.subr.mxu0 0.0
        %1309 = vmatpush2.msra.mxu0 0.0
        %1310 = vmatprep.subr.mxu0 0.0
        %1311 = vmatpush2.msra.mxu0 0.0
        %1312 = vmatprep.subr.mxu0 0.0
        %1313 = vmatpush2.msra.mxu0 0.0
        %1314 = vmatprep.subr.mxu0 0.0
        %1315 = vmatpush2.msra.mxu0 0.0
        %1316 = vmatprep.mubr.f32.mxu0 0.0
        %1317 = vmatmul.mubr.f32.gmra.mxu0 %v982
        %v1318 = vpop.f32.mrf.mxu0
        %v1319 = vadd.f32 0.0, %v1318
        %v1320 = vpop.f32.mrf.mxu0
        %1321 = vmatprep.mubr.f32.mxu0 0.0
        %1322 = vmatmul.mubr.f32.gmra.mxu0 %v985
        %v1323 = vpop.f32.mrf.mxu0
        %v1324 = vadd.f32 0.0, %v1323
        %v1325 = vpop.f32.mrf.mxu0
        %1326 = vdwg.mxu0
        %1327 = vmatprep.subr.mxu0 0.0
        %1328 = vmatpush1.msra.mxu0 0.0
        %1329 = vmatprep.subr.mxu0 0.0
        %1330 = vmatpush1.msra.mxu0 0.0
        %1331 = vmatprep.subr.mxu0 0.0
        %1332 = vmatpush1.msra.mxu0 0.0
        %1333 = vmatprep.subr.mxu0 0.0
        %1334 = vmatpush1.msra.mxu0 0.0
        %1335 = vmatprep.subr.mxu0 0.0
        %1336 = vmatpush1.msra.mxu0 0.0
        %1337 = vmatprep.subr.mxu0 0.0
        %1338 = vmatpush1.msra.mxu0 0.0
        %1339 = vmatprep.subr.mxu0 0.0
        %1340 = vmatpush1.msra.mxu0 0.0
        %1341 = vmatprep.subr.mxu0 0.0
        %1342 = vmatpush1.msra.mxu0 0.0
        %1343 = vmatprep.subr.mxu0 0.0
        %1344 = vmatpush1.msra.mxu0 0.0
        %1345 = vmatprep.subr.mxu0 0.0
        %1346 = vmatpush1.msra.mxu0 0.0
        %1347 = vmatprep.subr.mxu0 0.0
        %1348 = vmatpush1.msra.mxu0 0.0
        %1349 = vmatprep.subr.mxu0 0.0
        %1350 = vmatpush1.msra.mxu0 0.0
        %1351 = vmatprep.subr.mxu0 0.0
        %1352 = vmatpush1.msra.mxu0 0.0
        %1353 = vmatprep.subr.mxu0 0.0
        %1354 = vmatpush1.msra.mxu0 0.0
        %1355 = vmatprep.subr.mxu0 0.0
        %1356 = vmatpush1.msra.mxu0 %v1251
        %1357 = vmatprep.subr.mxu0 0.0
        %1358 = vmatpush1.msra.mxu0 %v1250
        %1359 = vmatprep.subr.mxu0 0.0
        %1360 = vmatpush2.msra.mxu0 0.0
        %1361 = vmatprep.subr.mxu0 0.0
        %1362 = vmatpush2.msra.mxu0 0.0
        %1363 = vmatprep.subr.mxu0 0.0
        %1364 = vmatpush2.msra.mxu0 0.0
        %1365 = vmatprep.subr.mxu0 0.0
        %1366 = vmatpush2.msra.mxu0 0.0
        %1367 = vmatprep.subr.mxu0 0.0
        %1368 = vmatpush2.msra.mxu0 0.0
        %1369 = vmatprep.subr.mxu0 0.0
        %1370 = vmatpush2.msra.mxu0 0.0
        %1371 = vmatprep.subr.mxu0 0.0
        %1372 = vmatpush2.msra.mxu0 0.0
        %1373 = vmatprep.subr.mxu0 0.0
        %1374 = vmatpush2.msra.mxu0 0.0
        %1375 = vmatprep.subr.mxu0 0.0
        %1376 = vmatpush2.msra.mxu0 0.0
        %1377 = vmatprep.subr.mxu0 0.0
        %1378 = vmatpush2.msra.mxu0 0.0
        %1379 = vmatprep.subr.mxu0 0.0
        %1380 = vmatpush2.msra.mxu0 0.0
        %1381 = vmatprep.subr.mxu0 0.0
        %1382 = vmatpush2.msra.mxu0 0.0
        %1383 = vmatprep.subr.mxu0 0.0
        %1384 = vmatpush2.msra.mxu0 0.0
        %1385 = vmatprep.subr.mxu0 0.0
        %1386 = vmatpush2.msra.mxu0 0.0
        %1387 = vmatprep.subr.mxu0 0.0
        %1388 = vmatpush2.msra.mxu0 0.0
        %1389 = vmatprep.subr.mxu0 0.0
        %1390 = vmatpush2.msra.mxu0 0.0
        %1391 = vmatprep.mubr.f32.mxu0 0.0
        %1392 = vmatmul.mubr.f32.gmra.mxu0 %v1063
        %v1393 = vpop.f32.mrf.mxu0
        %v1394 = vadd.f32 0.0, %v1393
        %v1395 = vpop.f32.mrf.mxu0
        %1396 = vmatprep.mubr.f32.mxu0 0.0
        %1397 = vmatmul.mubr.f32.gmra.mxu0 %v1066
        %v1398 = vpop.f32.mrf.mxu0
        %v1399 = vadd.f32 0.0, %v1398
        %v1400 = vpop.f32.mrf.mxu0
        %1401 = vdwg.mxu0
        %v1402 = vld [vmem:[#allocation16] sm:$0xff]
        %v1403 = vld [vmem:[#allocation16 + $0x8] sm:$0xff]
        %v1404 = vadd.f32 %v1242, %v1250
        %v1405 = vadd.f32 %v1243, %v1251
        %v1407 = vsel %vm727, %v1402, 0
        %v1410 = vsel %vm727, %v1403, 0
        %1412 = vmatprep.subr.mxu0 0.0
        %1413 = vmatpush1.msra.mxu0 0.0
        %1414 = vmatprep.subr.mxu0 0.0
        %1415 = vmatpush1.msra.mxu0 0.0
        %1416 = vmatprep.subr.mxu0 0.0
        %1417 = vmatpush1.msra.mxu0 0.0
        %1418 = vmatprep.subr.mxu0 0.0
        %1419 = vmatpush1.msra.mxu0 0.0
        %1420 = vmatprep.subr.mxu0 0.0
        %1421 = vmatpush1.msra.mxu0 0.0
        %1422 = vmatprep.subr.mxu0 0.0
        %1423 = vmatpush1.msra.mxu0 0.0
        %1424 = vmatprep.subr.mxu0 0.0
        %1425 = vmatpush1.msra.mxu0 0.0
        %1426 = vmatprep.subr.mxu0 0.0
        %1427 = vmatpush1.msra.mxu0 0.0
        %1428 = vmatprep.subr.mxu0 0.0
        %1429 = vmatpush1.msra.mxu0 0.0
        %1430 = vmatprep.subr.mxu0 0.0
        %1431 = vmatpush1.msra.mxu0 0.0
        %1432 = vmatprep.subr.mxu0 0.0
        %1433 = vmatpush1.msra.mxu0 0.0
        %1434 = vmatprep.subr.mxu0 0.0
        %1435 = vmatpush1.msra.mxu0 0.0
        %1436 = vmatprep.subr.mxu0 0.0
        %1437 = vmatpush1.msra.mxu0 0.0
        %1438 = vmatprep.subr.mxu0 0.0
        %1439 = vmatpush1.msra.mxu0 0.0
        %1440 = vmatprep.subr.mxu0 0.0
        %1441 = vmatpush1.msra.mxu0 %v1405
        %1442 = vmatprep.subr.mxu0 0.0
        %1443 = vmatpush1.msra.mxu0 %v1404
        %1444 = vmatprep.subr.mxu0 0.0
        %1445 = vmatpush2.msra.mxu0 0.0
        %1446 = vmatprep.subr.mxu0 0.0
        %1447 = vmatpush2.msra.mxu0 0.0
        %1448 = vmatprep.subr.mxu0 0.0
        %1449 = vmatpush2.msra.mxu0 0.0
        %1450 = vmatprep.subr.mxu0 0.0
        %1451 = vmatpush2.msra.mxu0 0.0
        %1452 = vmatprep.subr.mxu0 0.0
        %1453 = vmatpush2.msra.mxu0 0.0
        %1454 = vmatprep.subr.mxu0 0.0
        %1455 = vmatpush2.msra.mxu0 0.0
        %1456 = vmatprep.subr.mxu0 0.0
        %1457 = vmatpush2.msra.mxu0 0.0
        %1458 = vmatprep.subr.mxu0 0.0
        %1459 = vmatpush2.msra.mxu0 0.0
        %1460 = vmatprep.subr.mxu0 0.0
        %1461 = vmatpush2.msra.mxu0 0.0
        %1462 = vmatprep.subr.mxu0 0.0
        %1463 = vmatpush2.msra.mxu0 0.0
        %1464 = vmatprep.subr.mxu0 0.0
        %1465 = vmatpush2.msra.mxu0 0.0
        %1466 = vmatprep.subr.mxu0 0.0
        %1467 = vmatpush2.msra.mxu0 0.0
        %1468 = vmatprep.subr.mxu0 0.0
        %1469 = vmatpush2.msra.mxu0 0.0
        %1470 = vmatprep.subr.mxu0 0.0
        %1471 = vmatpush2.msra.mxu0 0.0
        %1472 = vmatprep.subr.mxu0 0.0
        %1473 = vmatpush2.msra.mxu0 0.0
        %1474 = vmatprep.subr.mxu0 0.0
        %1475 = vmatpush2.msra.mxu0 0.0
        %1476 = vmatprep.mubr.f32.mxu0 0.0
        %1477 = vmatmul.mubr.f32.gmra.mxu0 %v1407
        %v1478 = vpop.f32.mrf.mxu0
        %v1479 = vadd.f32 0.0, %v1478
        %v1480 = vpop.f32.mrf.mxu0
        %1481 = vmatprep.mubr.f32.mxu0 0.0
        %1482 = vmatmul.mubr.f32.gmra.mxu0 %v1410
        %v1483 = vpop.f32.mrf.mxu0
        %v1484 = vadd.f32 0.0, %v1483
        %v1485 = vpop.f32.mrf.mxu0
        %1486 = vdwg.mxu0
        %v1487 = vadd.f32 %v1319, %v1394
        %v1488 = vadd.f32 %v1324, %v1399
        %v1489 = vsub.f32 %v1479, %v1319
        %v1490 = vsub.f32 %v1484, %v1324
        %v1491 = vadd.f32 %v1489, %v1394
        %v1492 = vadd.f32 %v1490, %v1399
        %v1494 = vsel %vm727, %v1487, 0
        %v1497 = vsel %vm727, %v1488, 0
        %1499 = vmatprep.subr.mxu0 0.0
        %1500 = vmatpush1.msra.mxu0 0.0
        %1501 = vmatprep.subr.mxu0 0.0
        %1502 = vmatpush1.msra.mxu0 0.0
        %1503 = vmatprep.subr.mxu0 0.0
        %1504 = vmatpush1.msra.mxu0 0.0
        %1505 = vmatprep.subr.mxu0 0.0
        %1506 = vmatpush1.msra.mxu0 0.0
        %1507 = vmatprep.subr.mxu0 0.0
        %1508 = vmatpush1.msra.mxu0 0.0
        %1509 = vmatprep.subr.mxu0 0.0
        %1510 = vmatpush1.msra.mxu0 0.0
        %1511 = vmatprep.subr.mxu0 0.0
        %1512 = vmatpush1.msra.mxu0 0.0
        %1513 = vmatprep.subr.mxu0 0.0
        %1514 = vmatpush1.msra.mxu0 0.0
        %1515 = vmatprep.subr.mxu0 0.0
        %1516 = vmatpush1.msra.mxu0 0.0
        %1517 = vmatprep.subr.mxu0 0.0
        %1518 = vmatpush1.msra.mxu0 0.0
        %1519 = vmatprep.subr.mxu0 0.0
        %1520 = vmatpush1.msra.mxu0 0.0
        %1521 = vmatprep.subr.mxu0 0.0
        %1522 = vmatpush1.msra.mxu0 0.0
        %1523 = vmatprep.subr.mxu0 0.0
        %1524 = vmatpush1.msra.mxu0 0.0
        %1525 = vmatprep.subr.mxu0 0.0
        %1526 = vmatpush1.msra.mxu0 0.0
        %1527 = vmatprep.subr.mxu0 0.0
        %1528 = vmatpush1.msra.mxu0 %v720
        %1529 = vmatprep.subr.mxu0 0.0
        %1530 = vmatpush1.msra.mxu0 %v719
        %1531 = vmatprep.subr.mxu0 0.0
        %1532 = vmatpush2.msra.mxu0 0.0
        %1533 = vmatprep.subr.mxu0 0.0
        %1534 = vmatpush2.msra.mxu0 0.0
        %1535 = vmatprep.subr.mxu0 0.0
        %1536 = vmatpush2.msra.mxu0 0.0
        %1537 = vmatprep.subr.mxu0 0.0
        %1538 = vmatpush2.msra.mxu0 0.0
        %1539 = vmatprep.subr.mxu0 0.0
        %1540 = vmatpush2.msra.mxu0 0.0
        %1541 = vmatprep.subr.mxu0 0.0
        %1542 = vmatpush2.msra.mxu0 0.0
        %1543 = vmatprep.subr.mxu0 0.0
        %1544 = vmatpush2.msra.mxu0 0.0
        %1545 = vmatprep.subr.mxu0 0.0
        %1546 = vmatpush2.msra.mxu0 0.0
        %1547 = vmatprep.subr.mxu0 0.0
        %1548 = vmatpush2.msra.mxu0 0.0
        %1549 = vmatprep.subr.mxu0 0.0
        %1550 = vmatpush2.msra.mxu0 0.0
        %1551 = vmatprep.subr.mxu0 0.0
        %1552 = vmatpush2.msra.mxu0 0.0
        %1553 = vmatprep.subr.mxu0 0.0
        %1554 = vmatpush2.msra.mxu0 0.0
        %1555 = vmatprep.subr.mxu0 0.0
        %1556 = vmatpush2.msra.mxu0 0.0
        %1557 = vmatprep.subr.mxu0 0.0
        %1558 = vmatpush2.msra.mxu0 0.0
        %1559 = vmatprep.subr.mxu0 0.0
        %1560 = vmatpush2.msra.mxu0 0.0
        %1561 = vmatprep.subr.mxu0 0.0
        %1562 = vmatpush2.msra.mxu0 0.0
        %1563 = vmatprep.mubr.f32.mxu0 0.0
        %1564 = vmatmul.mubr.f32.gmra.mxu0 %v1494
        %v1565 = vpop.f32.mrf.mxu0
        %v1566 = vadd.f32 0.0, %v1565
        %v1567 = vpop.f32.mrf.mxu0
        %1568 = vmatprep.mubr.f32.mxu0 0.0
        %1569 = vmatmul.mubr.f32.gmra.mxu0 %v1497
        %v1570 = vpop.f32.mrf.mxu0
        %v1571 = vadd.f32 0.0, %v1570
        %v1572 = vpop.f32.mrf.mxu0
        %1573 = vdwg.mxu0
        %v1575 = vsel %vm727, %v1491, 0
        %v1578 = vsel %vm727, %v1492, 0
        %1580 = vmatprep.subr.mxu0 0.0
        %1581 = vmatpush1.msra.mxu0 0.0
        %1582 = vmatprep.subr.mxu0 0.0
        %1583 = vmatpush1.msra.mxu0 0.0
        %1584 = vmatprep.subr.mxu0 0.0
        %1585 = vmatpush1.msra.mxu0 0.0
        %1586 = vmatprep.subr.mxu0 0.0
        %1587 = vmatpush1.msra.mxu0 0.0
        %1588 = vmatprep.subr.mxu0 0.0
        %1589 = vmatpush1.msra.mxu0 0.0
        %1590 = vmatprep.subr.mxu0 0.0
        %1591 = vmatpush1.msra.mxu0 0.0
        %1592 = vmatprep.subr.mxu0 0.0
        %1593 = vmatpush1.msra.mxu0 0.0
        %1594 = vmatprep.subr.mxu0 0.0
        %1595 = vmatpush1.msra.mxu0 0.0
        %1596 = vmatprep.subr.mxu0 0.0
        %1597 = vmatpush1.msra.mxu0 0.0
        %1598 = vmatprep.subr.mxu0 0.0
        %1599 = vmatpush1.msra.mxu0 0.0
        %1600 = vmatprep.subr.mxu0 0.0
        %1601 = vmatpush1.msra.mxu0 0.0
        %1602 = vmatprep.subr.mxu0 0.0
        %1603 = vmatpush1.msra.mxu0 0.0
        %1604 = vmatprep.subr.mxu0 0.0
        %1605 = vmatpush1.msra.mxu0 0.0
        %1606 = vmatprep.subr.mxu0 0.0
        %1607 = vmatpush1.msra.mxu0 0.0
        %1608 = vmatprep.subr.mxu0 0.0
        %1609 = vmatpush1.msra.mxu0 %v722
        %1610 = vmatprep.subr.mxu0 0.0
        %1611 = vmatpush1.msra.mxu0 %v721
        %1612 = vmatprep.subr.mxu0 0.0
        %1613 = vmatpush2.msra.mxu0 0.0
        %1614 = vmatprep.subr.mxu0 0.0
        %1615 = vmatpush2.msra.mxu0 0.0
        %1616 = vmatprep.subr.mxu0 0.0
        %1617 = vmatpush2.msra.mxu0 0.0
        %1618 = vmatprep.subr.mxu0 0.0
        %1619 = vmatpush2.msra.mxu0 0.0
        %1620 = vmatprep.subr.mxu0 0.0
        %1621 = vmatpush2.msra.mxu0 0.0
        %1622 = vmatprep.subr.mxu0 0.0
        %1623 = vmatpush2.msra.mxu0 0.0
        %1624 = vmatprep.subr.mxu0 0.0
        %1625 = vmatpush2.msra.mxu0 0.0
        %1626 = vmatprep.subr.mxu0 0.0
        %1627 = vmatpush2.msra.mxu0 0.0
        %1628 = vmatprep.subr.mxu0 0.0
        %1629 = vmatpush2.msra.mxu0 0.0
        %1630 = vmatprep.subr.mxu0 0.0
        %1631 = vmatpush2.msra.mxu0 0.0
        %1632 = vmatprep.subr.mxu0 0.0
        %1633 = vmatpush2.msra.mxu0 0.0
        %1634 = vmatprep.subr.mxu0 0.0
        %1635 = vmatpush2.msra.mxu0 0.0
        %1636 = vmatprep.subr.mxu0 0.0
        %1637 = vmatpush2.msra.mxu0 0.0
        %1638 = vmatprep.subr.mxu0 0.0
        %1639 = vmatpush2.msra.mxu0 0.0
        %1640 = vmatprep.subr.mxu0 0.0
        %1641 = vmatpush2.msra.mxu0 0.0
        %1642 = vmatprep.subr.mxu0 0.0
        %1643 = vmatpush2.msra.mxu0 0.0
        %1644 = vmatprep.mubr.f32.mxu0 0.0
        %1645 = vmatmul.mubr.f32.gmra.mxu0 %v1575
        %v1646 = vpop.f32.mrf.mxu0
        %v1647 = vadd.f32 0.0, %v1646
        %v1648 = vpop.f32.mrf.mxu0
        %1649 = vmatprep.mubr.f32.mxu0 0.0
        %1650 = vmatmul.mubr.f32.gmra.mxu0 %v1578
        %v1651 = vpop.f32.mrf.mxu0
        %v1652 = vadd.f32 0.0, %v1651
        %v1653 = vpop.f32.mrf.mxu0
        %1654 = vdwg.mxu0
        %v1655 = vadd.f32 %v1487, %v1491
        %v1656 = vadd.f32 %v1488, %v1492
        %v1657 = vld [vmem:[#allocation20] sm:$0xff]
        %v1658 = vld [vmem:[#allocation20 + $0x8] sm:$0xff]
        %v1660 = vsel %vm727, %v1655, 0
        %v1663 = vsel %vm727, %v1656, 0
        %1665 = vmatprep.subr.mxu0 0.0
        %1666 = vmatpush1.msra.mxu0 0.0
        %1667 = vmatprep.subr.mxu0 0.0
        %1668 = vmatpush1.msra.mxu0 0.0
        %1669 = vmatprep.subr.mxu0 0.0
        %1670 = vmatpush1.msra.mxu0 0.0
        %1671 = vmatprep.subr.mxu0 0.0
        %1672 = vmatpush1.msra.mxu0 0.0
        %1673 = vmatprep.subr.mxu0 0.0
        %1674 = vmatpush1.msra.mxu0 0.0
        %1675 = vmatprep.subr.mxu0 0.0
        %1676 = vmatpush1.msra.mxu0 0.0
        %1677 = vmatprep.subr.mxu0 0.0
        %1678 = vmatpush1.msra.mxu0 0.0
        %1679 = vmatprep.subr.mxu0 0.0
        %1680 = vmatpush1.msra.mxu0 0.0
        %1681 = vmatprep.subr.mxu0 0.0
        %1682 = vmatpush1.msra.mxu0 0.0
        %1683 = vmatprep.subr.mxu0 0.0
        %1684 = vmatpush1.msra.mxu0 0.0
        %1685 = vmatprep.subr.mxu0 0.0
        %1686 = vmatpush1.msra.mxu0 0.0
        %1687 = vmatprep.subr.mxu0 0.0
        %1688 = vmatpush1.msra.mxu0 0.0
        %1689 = vmatprep.subr.mxu0 0.0
        %1690 = vmatpush1.msra.mxu0 0.0
        %1691 = vmatprep.subr.mxu0 0.0
        %1692 = vmatpush1.msra.mxu0 0.0
        %1693 = vmatprep.subr.mxu0 0.0
        %1694 = vmatpush1.msra.mxu0 %v1658
        %1695 = vmatprep.subr.mxu0 0.0
        %1696 = vmatpush1.msra.mxu0 %v1657
        %1697 = vmatprep.subr.mxu0 0.0
        %1698 = vmatpush2.msra.mxu0 0.0
        %1699 = vmatprep.subr.mxu0 0.0
        %1700 = vmatpush2.msra.mxu0 0.0
        %1701 = vmatprep.subr.mxu0 0.0
        %1702 = vmatpush2.msra.mxu0 0.0
        %1703 = vmatprep.subr.mxu0 0.0
        %1704 = vmatpush2.msra.mxu0 0.0
        %1705 = vmatprep.subr.mxu0 0.0
        %1706 = vmatpush2.msra.mxu0 0.0
        %1707 = vmatprep.subr.mxu0 0.0
        %1708 = vmatpush2.msra.mxu0 0.0
        %1709 = vmatprep.subr.mxu0 0.0
        %1710 = vmatpush2.msra.mxu0 0.0
        %1711 = vmatprep.subr.mxu0 0.0
        %1712 = vmatpush2.msra.mxu0 0.0
        %1713 = vmatprep.subr.mxu0 0.0
        %1714 = vmatpush2.msra.mxu0 0.0
        %1715 = vmatprep.subr.mxu0 0.0
        %1716 = vmatpush2.msra.mxu0 0.0
        %1717 = vmatprep.subr.mxu0 0.0
        %1718 = vmatpush2.msra.mxu0 0.0
        %1719 = vmatprep.subr.mxu0 0.0
        %1720 = vmatpush2.msra.mxu0 0.0
        %1721 = vmatprep.subr.mxu0 0.0
        %1722 = vmatpush2.msra.mxu0 0.0
        %1723 = vmatprep.subr.mxu0 0.0
        %1724 = vmatpush2.msra.mxu0 0.0
        %1725 = vmatprep.subr.mxu0 0.0
        %1726 = vmatpush2.msra.mxu0 0.0
        %1727 = vmatprep.subr.mxu0 0.0
        %1728 = vmatpush2.msra.mxu0 0.0
        %1729 = vmatprep.mubr.f32.mxu0 0.0
        %1730 = vmatmul.mubr.f32.gmra.mxu0 %v1660
        %v1731 = vpop.f32.mrf.mxu0
        %v1732 = vadd.f32 0.0, %v1731
        %v1733 = vpop.f32.mrf.mxu0
        %1734 = vmatprep.mubr.f32.mxu0 0.0
        %1735 = vmatmul.mubr.f32.gmra.mxu0 %v1663
        %v1736 = vpop.f32.mrf.mxu0
        %v1737 = vadd.f32 0.0, %v1736
        %v1738 = vpop.f32.mrf.mxu0
        %1739 = vdwg.mxu0
        %v1740 = vadd.f32 %v1566, %v1647
        %v1741 = vadd.f32 %v1571, %v1652
        %v1742 = vsub.f32 %v1732, %v1566
        %v1743 = vsub.f32 %v1737, %v1571
        %v1744 = vadd.f32 %v1742, %v1647
        %v1745 = vadd.f32 %v1743, %v1652
        %1746 = vst.msk [vmem:[%s714] sm:$0xff] %vm727, %v1740
        %1747 = vst.msk [vmem:[%s714 + $0x8] sm:$0xff] %vm727, %v1741
        %s1748 = scalar_lea.vmem %s714, 16 [#allocation22]
        %1749 = vst.msk [vmem:[%s1748] sm:$0xff] %vm727, %v1744
        %1750 = vst.msk [vmem:[%s1748 + $0x8] sm:$0xff] %vm727, %v1745
        %s1751 = sand.u32 %s346, 1
        %s1752 = scalar_lea.sflag [#allocation4], %s1751
        %s1753 = sand.u32 %s346, 1
        %s1754 = smul.addr %s1753, 32
        %s1755 = scalar_lea.vmem [#allocation22], %s1754
        // Predicated region
        $region121: #{tpu_custom_call.1} parent=71 // pred_check
          %p1756 = pneg %p356
        $region122: #{tpu_custom_call.1} parent=71 // pred_check_branch
          %1758 = sbr.rel (%p1756) target = $region124
        $region123: #{tpu_custom_call.1} parent=71 // pred_region
          %s1760 = ssub.s32 512, 512
          %1761 = vsyncadd %s1752, %s1760
          %s1762 = smul.addr %s40, 4
          %s1763 = smul.addr %s1762, 128
          %s1764 = scalar_lea.hbm %s13, %s1763
          %s1765 = sshll.u32 %s1755, 4
          %s1766 = int_to_ptr.vmem [resolvable:$true] %s1765
          %1771 = dma.vmem_to_hbm [thread:$0]  %s1766, 512, %s1764, %s1752, 128, 128, 8
        $region124: #{tpu_custom_call.1} parent=71 // pred_fallthru
          _
      $region72: #{tpu_custom_call.1} parent=5 // pred_fallthru
        _
      %p1772 = scmp.le.s32.totalorder 2, %s35
      // Predicated region
      $region125: #{tpu_custom_call.1} parent=5 // pred_check
        %p1773 = pneg %p1772
      $region126: #{tpu_custom_call.1} parent=5 // pred_check_branch
        %1775 = sbr.rel (%p1773) target = $region128
      $region127: #{tpu_custom_call.1} parent=5 // pred_region
        %s1776 = ssub.s32 %s35, 2
        // Predicated region
        $region129: #{tpu_custom_call.1} parent=127 // pred_check
          %p1777 = pneg %p362
        $region130: #{tpu_custom_call.1} parent=127 // pred_check_branch
          %1779 = sbr.rel (%p1777) target = $region132
        $region131: #{tpu_custom_call.1} parent=127 // pred_region
          %s1780 = sand.u32 %s347, 1
          %s1781 = scalar_lea.sflag [#allocation4], %s1780
          %s1782 = sand.u32 %s347, 1
          %s1783 = smul.addr %s1782, 32
          %s1784 = scalar_lea.vmem [#allocation22], %s1783
          %1785 = dma.done %s1781, 512
        $region132: #{tpu_custom_call.1} parent=127 // pred_fallthru
          _
      $region128: #{tpu_custom_call.1} parent=5 // pred_fallthru
        _
    $region6: #{tpu_custom_call.1} parent=1 // loop_footer
      %s39 = sadd.s32 1, %s35
    $region7: #{tpu_custom_call.1} parent=1 // loop_footer_branch
      %34 = sbr.rel target = $region3
    $region8: #{tpu_custom_call.1} parent=1 // loop_exit
      _
    %1786 = vsyncpa [#allocation3], 1
    %s1787 = scalar_lea.sflag [#allocation3], 1
    %1788 = vsyncpa %s1787, 1
    %1789 = vsyncpa [#allocation6], 1
    %s1790 = scalar_lea.sflag [#allocation6], 1
    %1791 = vsyncpa %s1790, 1
    %1792 = vsyncpa [#allocation9], 1
    %s1793 = scalar_lea.sflag [#allocation9], 1
    %1794 = vsyncpa %s1793, 1
    %1795 = vsyncpa [#allocation12], 1
    %1796 = vsyncpa [#allocation15], 1
    %1797 = vsyncpa [#allocation18], 1
    %1798 = vsyncpa [#allocation21], 1
    %1799 = vsyncpa [#allocation4], 1
    %s1800 = scalar_lea.sflag [#allocation4], 1
    %1801 = vsyncpa %s1800, 1

</llo_original>
